<compile_context>
chip_gen: v7x
topology: tpu7x:2x2x1
jax: 0.10.0
libtpu: 0.0.40
codegen_flags: <defaults>
</compile_context>

<pallas_src>
import math

import jax
import jax.numpy as jnp
from jax.experimental import pallas as pl
from jax.experimental.pallas import tpu as pltpu


# ----------------------------- Pallas kernel --------------------------------


def _sa1_kernel(scal_ref, s_ref, e_ref, f_ref, x_ref, o_ref):
    # scal_ref: SMEM (1,)  [wh_sum = sum(fc_h.weight)]
    # s_ref:    VMEM (HW, H)  S[i*W+j, i] = ww[j]
    # e_ref:    VMEM (H, HW)  E[i, i*W+j] = 1
    # f_ref:    VMEM (HW, W)  F[i*W+j, j] = 1
    # x_ref:    VMEM (TM, HW) lane-dense input slab
    # o_ref:    VMEM (TM, HW) lane-dense output slab
    hi = jax.lax.Precision.HIGHEST
    x = x_ref[...]                                                   # (TM, HW) f32
    wh_sum = scal_ref[0]                                             # scalar f32

    # fc_w + softmax over H (bias is uniform over H -> softmax-invariant, dropped).
    # score_h[m, i] = sum_j x[m, i*W+j] * ww[j]  via MXU.
    score_h = jnp.dot(x, s_ref[...], precision=hi,
                      preferred_element_type=jnp.float32)            # (TM, H)
    m_h = jnp.max(score_h, axis=-1, keepdims=True)
    e_h = jnp.exp(score_h - m_h)
    a_h = e_h / jnp.sum(e_h, axis=-1, keepdims=True)                 # (TM, H)

    # First bmm collapsed: v[m, j] = sum_i a_h[m, i] * x[m, i*W+j]   (all on MXU/VPU)
    a_bc = jnp.dot(a_h, e_ref[...], precision=hi,
                   preferred_element_type=jnp.float32)               # (TM, HW)
    v = jnp.dot(x * a_bc, f_ref[...], precision=hi,
                preferred_element_type=jnp.float32)                  # (TM, W)

    # fc_h on the constant-row X_c^T + softmax over W (bias dropped, invariant).
    score_w = v * wh_sum                                             # (TM, W)
    m_w = jnp.max(score_w, axis=-1, keepdims=True)
    e_w = jnp.exp(score_w - m_w)
    a_w = e_w / jnp.sum(e_w, axis=-1, keepdims=True)                 # (TM, W)

    # Second bmm collapsed: every output element of map m equals s[m] = <a_w[m], v[m]>.
    s = jnp.sum(a_w * v, axis=-1, keepdims=True)                     # (TM, 1)
    o_ref[...] = jnp.broadcast_to(s, o_ref.shape)                    # (TM, HW)


# ----------------------------- tiling helpers --------------------------------


def _round_up(x, k):
    return ((x + k - 1) // k) * k


def _pick_tile_m(m, hw, budget_bytes=24 * 1024 * 1024):
    """Map-axis tile size.

    Double-buffered (input + output) lane-dense f32 slabs must fit `budget_bytes`
    (conservative for v7x's 64 MiB VMEM; v6e / v5e have more headroom).  Keep tm a
    multiple of 8 (sublane tiling) and leave >= 2 grid tiles whenever there is enough
    work so the parallel map axis can shard across v7x's two TensorCores.
    """
    lane = 128
    hw_pad = _round_up(hw, lane)
    per_map_bytes = 2 * 2 * hw_pad * 4            # (in + out) x double-buffering, f32
    tm = max(8, (budget_bytes // per_map_bytes) // 8 * 8)
    m8 = _round_up(m, 8)
    if m8 >= 16:
        tm = min(tm, _round_up(m8 // 2, 8))       # ensure at least two grid tiles
    tm = min(tm, m8)
    return int(tm)


# ----------------------------- wrapper ---------------------------------------


def sa1_forward(params, x):
    """SA1 forward. x: (B, C, H, W) float32 -> (B, C, H, W) float32."""
    b, c, h, w = x.shape
    ww = params["fc_w_w"]                           # (1, W)
    wh = params["fc_h_w"]                           # (1, H)
    assert ww.shape == (1, w) and wh.shape == (1, h), "feature h/w must match hw param"
    # fc_w_b / fc_h_b are uniform shifts along the softmax axes -> mathematically
    # cancel; intentionally not passed to the kernel.

    hw = h * w
    m = b * c
    x2d = x.reshape(m, hw).astype(jnp.float32)      # lane-dense slab (free reshape)

    # Host-precomputed constant matrices that move both reductions onto the MXU.
    eye_h = jnp.eye(h, dtype=jnp.float32)
    eye_w = jnp.eye(w, dtype=jnp.float32)
    s_mat = (eye_h[:, None, :] * ww.reshape(1, w, 1)).reshape(hw, h)        # (HW, H)
    e_mat = jnp.broadcast_to(eye_h[:, :, None], (h, h, w)).reshape(h, hw)   # (H, HW)
    f_mat = jnp.tile(eye_w, (h, 1))                                         # (HW, W)
    scal = jnp.sum(wh).reshape(1).astype(jnp.float32)                       # [wh_sum]

    tm = _pick_tile_m(m, hw)
    m_pad = _round_up(m, tm)
    if m_pad != m:
        # Zero rows are benign: softmax(0) is uniform, v = 0, s = 0 (no Inf/NaN).
        x2d = jnp.pad(x2d, ((0, m_pad - m), (0, 0)))
    grid = (m_pad // tm,)

    out = pl.pallas_call(
        _sa1_kernel,
        out_shape=jax.ShapeDtypeStruct((m_pad, hw), jnp.float32),
        grid_spec=pltpu.PrefetchScalarGridSpec(
            num_scalar_prefetch=0,
            grid=grid,
            in_specs=[
                pl.BlockSpec(memory_space=pltpu.MemorySpace.SMEM),   # [wh_sum] scalar
                pl.BlockSpec((hw, h), lambda i: (0, 0)),             # S (loaded once)
                pl.BlockSpec((h, hw), lambda i: (0, 0)),             # E (loaded once)
                pl.BlockSpec((hw, w), lambda i: (0, 0)),             # F (loaded once)
                pl.BlockSpec((tm, hw), lambda i: (i, 0)),            # x slab, tiled over M
            ],
            out_specs=pl.BlockSpec((tm, hw), lambda i: (i, 0)),      # lane-dense output
        ),
        compiler_params=pltpu.CompilerParams(
            dimension_semantics=("parallel",),       # shard map tiles across v7x's 2 TCs
            vmem_limit_bytes=48 * 1024 * 1024,
        ),
    )(scal, s_mat, e_mat, f_mat, x2d)

    if m_pad != m:
        out = out[:m]
    return out.reshape(b, c, h, w)


# ----------------------------- parameter init --------------------------------


def init_sa1_params(key, h, w):
    """Matches SA1.__init__weight: kaiming_normal_(fan_in, relu), biases = 0."""
    k1, k2 = jax.random.split(key)
    return {
        "fc_w_w": jax.random.normal(k1, (1, w), jnp.float32) * math.sqrt(2.0 / w),
        "fc_w_b": jnp.zeros((1,), jnp.float32),
        "fc_h_w": jax.random.normal(k2, (1, h), jnp.float32) * math.sqrt(2.0 / h),
        "fc_h_b": jnp.zeros((1,), jnp.float32),
    }


# ----------------------------- literal pure-JAX reference --------------------


def sa1_reference(params, x):
    """Direct translation of the PyTorch forward (repeat + bmm form)."""
    b, c, h, w = x.shape
    ww, bw = params["fc_w_w"], params["fc_w_b"]
    wh, bh = params["fc_h_w"], params["fc_h_b"]
    hi = jax.lax.Precision.HIGHEST
    xm = x.reshape(-1, h, w)                                            # (M, h, w)
    h_weight = jax.nn.softmax(
        jnp.einsum("mij,oj->mio", xm, ww, precision=hi) + bw, axis=1)   # (M, h, 1)
    h_weight = jnp.tile(jnp.transpose(h_weight, (0, 2, 1)), (1, h, 1))  # (M, h, h)
    x_c = jnp.einsum("mij,mjk->mik", h_weight, xm, precision=hi)        # (M, h, w)
    x_c = jnp.transpose(x_c, (0, 2, 1))                                 # (M, w, h)
    w_weight = jax.nn.softmax(
        jnp.einsum("mij,oj->mio", x_c, wh, precision=hi) + bh, axis=1)  # (M, w, 1)
    w_weight = jnp.tile(jnp.transpose(w_weight, (0, 2, 1)), (1, w, 1))  # (M, w, w)
    x_out = jnp.einsum("mij,mjk->mik", w_weight, x_c, precision=hi)     # (M, w, h)
    x_out = jnp.transpose(x_out, (0, 2, 1))                             # (M, h, w)
    return x_out.reshape(b, c, h, w)


# ----------------------------------- main ------------------------------------


if __name__ == "__main__":
    key = jax.random.PRNGKey(0)
    kp, kx = jax.random.split(key)

    B, C, H, W = 2, 4, 16, 16            # small shapes consistent with hw=[H, W]
    params = init_sa1_params(kp, H, W)
    x = jax.random.normal(kx, (B, C, H, W), jnp.float32)

    fwd = jax.jit(sa1_forward)
    out = jax.block_until_ready(fwd(params, x))
    assert out.shape == (B, C, H, W), out.shape

    ref = jax.block_until_ready(sa1_reference(params, x))
    max_err = float(jnp.max(jnp.abs(out - ref)))
    assert jnp.allclose(out, ref, atol=1e-4, rtol=1e-4), max_err

    print("KERNEL_OK")
</pallas_src>

<mosaic_0001>
module attributes {stable_mosaic.version = 11 : i64} {
  func.func @_sa1_kernel(%arg0: i32, %arg1: memref<1xf32, #tpu.memory_space<smem>>, %arg2: memref<256x16xf32, #tpu.memory_space<vmem>>, %arg3: memref<16x256xf32, #tpu.memory_space<vmem>>, %arg4: memref<256x16xf32, #tpu.memory_space<vmem>>, %arg5: memref<8x256xf32, #tpu.memory_space<vmem>>, %arg6: memref<8x256xf32, #tpu.memory_space<vmem>>) attributes {dimension_semantics = [#tpu.dimension_semantics<parallel>], iteration_bounds = array<i64: 1>, scalar_prefetch = 0 : i64, scratch_operands = 0 : i64, tpu.core_type = #tpu.core_type<tc>, window_params = [{transform_indices = @transform_0, window_bounds = array<i64: 1>}, {pipeline_mode = #tpu.pipeline_mode<synchronous>, transform_indices = @transform_1, window_bounds = array<i64: 256, 16>}, {pipeline_mode = #tpu.pipeline_mode<synchronous>, transform_indices = @transform_2, window_bounds = array<i64: 16, 256>}, {pipeline_mode = #tpu.pipeline_mode<synchronous>, transform_indices = @transform_3, window_bounds = array<i64: 256, 16>}, {transform_indices = @transform_4, window_bounds = array<i64: 8, 256>}, {transform_indices = @transform_5, window_bounds = array<i64: 8, 256>}]} {
    %c0 = arith.constant 0 : index
    %c0_0 = arith.constant 0 : index
    %0 = vector.load %arg5[%c0, %c0_0] : memref<8x256xf32, #tpu.memory_space<vmem>>, vector<8x256xf32>
    %c0_1 = arith.constant 0 : index
    %1 = memref.load %arg1[%c0_1] : memref<1xf32, #tpu.memory_space<smem>>
    %c0_2 = arith.constant 0 : index
    %c0_3 = arith.constant 0 : index
    %2 = vector.load %arg2[%c0_2, %c0_3] : memref<256x16xf32, #tpu.memory_space<vmem>>, vector<256x16xf32>
    %cst = arith.constant dense<0.000000e+00> : vector<8x16xf32>
    %3 = tpu.matmul %0, %2, %cst {dimension_numbers = #tpu.dot_dimension_numbers<[1], [0], [0], [1], [0, 0, 1, 1], [], []>, precision = #tpu.contract_precision<fp32>} : vector<8x256xf32>, vector<256x16xf32>, vector<8x16xf32> -> vector<8x16xf32>
    %cst_4 = arith.constant dense<0xFF800000> : vector<8xf32>
    %4 = vector.multi_reduction <maximumf>, %3, %cst_4 [1] : vector<8x16xf32> to vector<8xf32>
    %5 = vector.shape_cast %4 : vector<8xf32> to vector<8x1xf32>
    %6 = vector.broadcast %5 : vector<8x1xf32> to vector<8x16xf32>
    %7 = arith.subf %3, %6 : vector<8x16xf32>
    %8 = math.exp %7 : vector<8x16xf32>
    %cst_5 = arith.constant dense<0.000000e+00> : vector<8xf32>
    %9 = vector.multi_reduction <add>, %8, %cst_5 [1] : vector<8x16xf32> to vector<8xf32>
    %10 = vector.shape_cast %9 : vector<8xf32> to vector<8x1xf32>
    %11 = vector.broadcast %10 : vector<8x1xf32> to vector<8x16xf32>
    %12 = arith.divf %8, %11 : vector<8x16xf32>
    %c0_6 = arith.constant 0 : index
    %c0_7 = arith.constant 0 : index
    %13 = vector.load %arg3[%c0_6, %c0_7] : memref<16x256xf32, #tpu.memory_space<vmem>>, vector<16x256xf32>
    %cst_8 = arith.constant dense<0.000000e+00> : vector<8x256xf32>
    %14 = tpu.matmul %12, %13, %cst_8 {dimension_numbers = #tpu.dot_dimension_numbers<[1], [0], [0], [1], [0, 0, 1, 1], [], []>, precision = #tpu.contract_precision<fp32>} : vector<8x16xf32>, vector<16x256xf32>, vector<8x256xf32> -> vector<8x256xf32>
    %15 = arith.mulf %0, %14 : vector<8x256xf32>
    %c0_9 = arith.constant 0 : index
    %c0_10 = arith.constant 0 : index
    %16 = vector.load %arg4[%c0_9, %c0_10] : memref<256x16xf32, #tpu.memory_space<vmem>>, vector<256x16xf32>
    %cst_11 = arith.constant dense<0.000000e+00> : vector<8x16xf32>
    %17 = tpu.matmul %15, %16, %cst_11 {dimension_numbers = #tpu.dot_dimension_numbers<[1], [0], [0], [1], [0, 0, 1, 1], [], []>, precision = #tpu.contract_precision<fp32>} : vector<8x256xf32>, vector<256x16xf32>, vector<8x16xf32> -> vector<8x16xf32>
    %18 = vector.broadcast %1 : f32 to vector<8x16xf32>
    %19 = arith.mulf %17, %18 : vector<8x16xf32>
    %cst_12 = arith.constant dense<0xFF800000> : vector<8xf32>
    %20 = vector.multi_reduction <maximumf>, %19, %cst_12 [1] : vector<8x16xf32> to vector<8xf32>
    %21 = vector.shape_cast %20 : vector<8xf32> to vector<8x1xf32>
    %22 = vector.broadcast %21 : vector<8x1xf32> to vector<8x16xf32>
    %23 = arith.subf %19, %22 : vector<8x16xf32>
    %24 = math.exp %23 : vector<8x16xf32>
    %cst_13 = arith.constant dense<0.000000e+00> : vector<8xf32>
    %25 = vector.multi_reduction <add>, %24, %cst_13 [1] : vector<8x16xf32> to vector<8xf32>
    %26 = vector.shape_cast %25 : vector<8xf32> to vector<8x1xf32>
    %27 = vector.broadcast %26 : vector<8x1xf32> to vector<8x16xf32>
    %28 = arith.divf %24, %27 : vector<8x16xf32>
    %29 = arith.mulf %28, %17 : vector<8x16xf32>
    %cst_14 = arith.constant dense<0.000000e+00> : vector<8xf32>
    %30 = vector.multi_reduction <add>, %29, %cst_14 [1] : vector<8x16xf32> to vector<8xf32>
    %31 = vector.shape_cast %30 : vector<8xf32> to vector<8x1xf32>
    %32 = vector.shape_cast %31 : vector<8x1xf32> to vector<8x1xf32>
    %33 = vector.broadcast %32 : vector<8x1xf32> to vector<8x256xf32>
    %c0_15 = arith.constant 0 : index
    %c0_16 = arith.constant 0 : index
    %34 = vector.load %arg6[%c0_15, %c0_16] : memref<8x256xf32, #tpu.memory_space<vmem>>, vector<8x256xf32>
    tpu.vector_store %arg6[%c0_15, %c0_16], %33 {strides = array<i32>} : memref<8x256xf32, #tpu.memory_space<vmem>>, vector<8x256xf32>,
    return
  }
  func.func @transform_0(%arg0: i32) -> i32 {
    %c0_i32 = arith.constant 0 : i32
    %c0_i32_0 = arith.constant 0 : i32
    return %c0_i32 : i32
  }
  func.func @transform_1(%arg0: i32) -> (i32, i32) {
    %c0_i32 = arith.constant 0 : i32
    %c0_i32_0 = arith.constant 0 : i32
    %c0_i32_1 = arith.constant 0 : i32
    return %c0_i32, %c0_i32_0 : i32, i32
  }
  func.func @transform_2(%arg0: i32) -> (i32, i32) {
    %c0_i32 = arith.constant 0 : i32
    %c0_i32_0 = arith.constant 0 : i32
    %c0_i32_1 = arith.constant 0 : i32
    return %c0_i32, %c0_i32_0 : i32, i32
  }
  func.func @transform_3(%arg0: i32) -> (i32, i32) {
    %c0_i32 = arith.constant 0 : i32
    %c0_i32_0 = arith.constant 0 : i32
    %c0_i32_1 = arith.constant 0 : i32
    return %c0_i32, %c0_i32_0 : i32, i32
  }
  func.func @transform_4(%arg0: i32) -> (i32, i32) {
    %c0_i32 = arith.constant 0 : i32
    %c0_i32_0 = arith.constant 0 : i32
    return %arg0, %c0_i32 : i32, i32
  }
  func.func @transform_5(%arg0: i32) -> (i32, i32) {
    %c0_i32 = arith.constant 0 : i32
    %c0_i32_0 = arith.constant 0 : i32
    return %arg0, %c0_i32 : i32, i32
  }
}

</mosaic_0001>

<llo_original>
// kernel: sa1_forward.1
$region0: #{sa1_forward.1}
  #allocation0 [shape = 'u32[]', space=smem, size = 0x4, offset = 0x4, fixed_abs, tag = 'smem constant byte address 0x4 - core index']
  #allocation1 [shape = 'u32[144,128]{1,0:T(1,128)}', space=vmem, size = 0x12000, scoped, tag = 'internal scratch']
  #allocation2 [shape = 'f32[1]{0:T(128)S(6)}', space=smem, size = 0x200, scoped, tag = 'scoped memory for sa1_forward.1']
  %s0 = inlined_call_operand.<no memory space> [shape: f32[1], index: 0, kind: input, shape index: {}]
  %s1 = inlined_call_operand.vmem [shape: f32[256,16], index: 1, kind: input, shape index: {}]
  %s2 = inlined_call_operand.vmem [shape: f32[16,256], index: 2, kind: input, shape index: {}]
  %s3 = inlined_call_operand.vmem [shape: f32[256,16], index: 3, kind: input, shape index: {}]
  %s4 = inlined_call_operand.vmem [shape: f32[8,256], index: 4, kind: input, shape index: {}]
  %s5 = inlined_call_operand.vmem [shape: f32[8,256], index: 5, kind: output, shape index: {}]
  %s6 = sld [smem:[#allocation0]]
  $region30: #{sa1_forward.1} parent=0
    _
  %s8 = ssub.s32 1, %s6
  %s9 = scalar_select 0, %s8, %s6
  %10 = sst [smem:[#allocation2]] %s0
  // Predicated region
  $region2: #{sa1_forward.1} parent=0 // pred_check
    _
  $region3: #{sa1_forward.1} parent=0 // pred_check_branch
    %12 = sbr.rel (0) target = $region5
  $region4: #{sa1_forward.1} parent=0 // pred_region
    _
  $region5: #{sa1_forward.1} parent=0 // pred_fallthru
    _
  // Predicated region
  $region6: #{sa1_forward.1} parent=0 // pred_check
    _
  $region7: #{sa1_forward.1} parent=0 // pred_check_branch
    %14 = sbr.rel (0) target = $region9
  $region8: #{sa1_forward.1} parent=0 // pred_region
    _
  $region9: #{sa1_forward.1} parent=0 // pred_fallthru
    _
  // Predicated region
  $region10: #{sa1_forward.1} parent=0 // pred_check
    _
  $region11: #{sa1_forward.1} parent=0 // pred_check_branch
    %16 = sbr.rel (0) target = $region13
  $region12: #{sa1_forward.1} parent=0 // pred_region
    _
  $region13: #{sa1_forward.1} parent=0 // pred_fallthru
    _
  // Predicated region
  $region14: #{sa1_forward.1} parent=0 // pred_check
    _
  $region15: #{sa1_forward.1} parent=0 // pred_check_branch
    %18 = sbr.rel (0) target = $region17
  $region16: #{sa1_forward.1} parent=0 // pred_region
    _
  $region17: #{sa1_forward.1} parent=0 // pred_fallthru
    _
  // Predicated region
  $region18: #{sa1_forward.1} parent=0 // pred_check
    _
  $region19: #{sa1_forward.1} parent=0 // pred_check_branch
    %20 = sbr.rel (0) target = $region21
  $region20: #{sa1_forward.1} parent=0 // pred_region
    _
  $region21: #{sa1_forward.1} parent=0 // pred_fallthru
    _
  %v21 = vld [vmem:[%s4] sm:$0xff]
  %v22 = vld [vmem:[%s4 + $0x8] sm:$0xff]
  %s23 = sld [smem:[#allocation2]]
  %v24 = vld [vmem:[%s1] sm:$0xff]
  %v25 = vld [vmem:[%s1 + $0x8] sm:$0xff]
  %v26 = vld [vmem:[%s1 + $0x10] sm:$0xff]
  %v27 = vld [vmem:[%s1 + $0x18] sm:$0xff]
  %v28 = vld [vmem:[%s1 + $0x20] sm:$0xff]
  %v29 = vld [vmem:[%s1 + $0x28] sm:$0xff]
  %v30 = vld [vmem:[%s1 + $0x30] sm:$0xff]
  %v31 = vld [vmem:[%s1 + $0x38] sm:$0xff]
  %v32 = vld [vmem:[%s1 + $0x40] sm:$0xff]
  %v33 = vld [vmem:[%s1 + $0x48] sm:$0xff]
  %v34 = vld [vmem:[%s1 + $0x50] sm:$0xff]
  %v35 = vld [vmem:[%s1 + $0x58] sm:$0xff]
  %v36 = vld [vmem:[%s1 + $0x60] sm:$0xff]
  %v37 = vld [vmem:[%s1 + $0x68] sm:$0xff]
  %v38 = vld [vmem:[%s1 + $0x70] sm:$0xff]
  %v39 = vld [vmem:[%s1 + $0x78] sm:$0xff]
  %v40 = vld [vmem:[%s1 + $0x80] sm:$0xff]
  %v41 = vld [vmem:[%s1 + $0x88] sm:$0xff]
  %v42 = vld [vmem:[%s1 + $0x90] sm:$0xff]
  %v43 = vld [vmem:[%s1 + $0x98] sm:$0xff]
  %v44 = vld [vmem:[%s1 + $0xa0] sm:$0xff]
  %v45 = vld [vmem:[%s1 + $0xa8] sm:$0xff]
  %v46 = vld [vmem:[%s1 + $0xb0] sm:$0xff]
  %v47 = vld [vmem:[%s1 + $0xb8] sm:$0xff]
  %v48 = vld [vmem:[%s1 + $0xc0] sm:$0xff]
  %v49 = vld [vmem:[%s1 + $0xc8] sm:$0xff]
  %v50 = vld [vmem:[%s1 + $0xd0] sm:$0xff]
  %v51 = vld [vmem:[%s1 + $0xd8] sm:$0xff]
  %v52 = vld [vmem:[%s1 + $0xe0] sm:$0xff]
  %v53 = vld [vmem:[%s1 + $0xe8] sm:$0xff]
  %v54 = vld [vmem:[%s1 + $0xf0] sm:$0xff]
  %v55 = vld [vmem:[%s1 + $0xf8] sm:$0xff]
  %56 = vmatprep.subr.mxu0 0.0
  %v57 = vand.u32 %v24, 4294901760
  %58 = vmatpush1.msra.mxu0 %v57
  %59 = vmatprep.subr.mxu0 0.0
  %v60 = vand.u32 %v25, 4294901760
  %61 = vmatpush1.msra.mxu0 %v60
  %62 = vmatprep.subr.mxu0 0.0
  %v63 = vand.u32 %v26, 4294901760
  %64 = vmatpush1.msra.mxu0 %v63
  %65 = vmatprep.subr.mxu0 0.0
  %v66 = vand.u32 %v27, 4294901760
  %67 = vmatpush1.msra.mxu0 %v66
  %68 = vmatprep.subr.mxu0 0.0
  %v69 = vand.u32 %v28, 4294901760
  %70 = vmatpush1.msra.mxu0 %v69
  %71 = vmatprep.subr.mxu0 0.0
  %v72 = vand.u32 %v29, 4294901760
  %73 = vmatpush1.msra.mxu0 %v72
  %74 = vmatprep.subr.mxu0 0.0
  %v75 = vand.u32 %v30, 4294901760
  %76 = vmatpush1.msra.mxu0 %v75
  %77 = vmatprep.subr.mxu0 0.0
  %v78 = vand.u32 %v31, 4294901760
  %79 = vmatpush1.msra.mxu0 %v78
  %80 = vmatprep.subr.mxu0 0.0
  %v81 = vand.u32 %v32, 4294901760
  %82 = vmatpush1.msra.mxu0 %v81
  %83 = vmatprep.subr.mxu0 0.0
  %v84 = vand.u32 %v33, 4294901760
  %85 = vmatpush1.msra.mxu0 %v84
  %86 = vmatprep.subr.mxu0 0.0
  %v87 = vand.u32 %v34, 4294901760
  %88 = vmatpush1.msra.mxu0 %v87
  %89 = vmatprep.subr.mxu0 0.0
  %v90 = vand.u32 %v35, 4294901760
  %91 = vmatpush1.msra.mxu0 %v90
  %92 = vmatprep.subr.mxu0 0.0
  %v93 = vand.u32 %v36, 4294901760
  %94 = vmatpush1.msra.mxu0 %v93
  %95 = vmatprep.subr.mxu0 0.0
  %v96 = vand.u32 %v37, 4294901760
  %97 = vmatpush1.msra.mxu0 %v96
  %98 = vmatprep.subr.mxu0 0.0
  %v99 = vand.u32 %v38, 4294901760
  %100 = vmatpush1.msra.mxu0 %v99
  %101 = vmatprep.subr.mxu0 0.0
  %v102 = vand.u32 %v39, 4294901760
  %103 = vmatpush1.msra.mxu0 %v102
  %104 = vmatprep.subr.mxu0 0.0
  %v105 = vand.u32 %v40, 4294901760
  %106 = vmatpush1.msra.mxu0 %v105
  %107 = vmatprep.subr.mxu0 0.0
  %v108 = vand.u32 %v41, 4294901760
  %109 = vmatpush1.msra.mxu0 %v108
  %110 = vmatprep.subr.mxu0 0.0
  %v111 = vand.u32 %v42, 4294901760
  %112 = vmatpush1.msra.mxu0 %v111
  %113 = vmatprep.subr.mxu0 0.0
  %v114 = vand.u32 %v43, 4294901760
  %115 = vmatpush1.msra.mxu0 %v114
  %116 = vmatprep.subr.mxu0 0.0
  %v117 = vand.u32 %v44, 4294901760
  %118 = vmatpush1.msra.mxu0 %v117
  %119 = vmatprep.subr.mxu0 0.0
  %v120 = vand.u32 %v45, 4294901760
  %121 = vmatpush1.msra.mxu0 %v120
  %122 = vmatprep.subr.mxu0 0.0
  %v123 = vand.u32 %v46, 4294901760
  %124 = vmatpush1.msra.mxu0 %v123
  %125 = vmatprep.subr.mxu0 0.0
  %v126 = vand.u32 %v47, 4294901760
  %127 = vmatpush1.msra.mxu0 %v126
  %128 = vmatprep.subr.mxu0 0.0
  %v129 = vand.u32 %v48, 4294901760
  %130 = vmatpush1.msra.mxu0 %v129
  %131 = vmatprep.subr.mxu0 0.0
  %v132 = vand.u32 %v49, 4294901760
  %133 = vmatpush1.msra.mxu0 %v132
  %134 = vmatprep.subr.mxu0 0.0
  %v135 = vand.u32 %v50, 4294901760
  %136 = vmatpush1.msra.mxu0 %v135
  %137 = vmatprep.subr.mxu0 0.0
  %v138 = vand.u32 %v51, 4294901760
  %139 = vmatpush1.msra.mxu0 %v138
  %140 = vmatprep.subr.mxu0 0.0
  %v141 = vand.u32 %v52, 4294901760
  %142 = vmatpush1.msra.mxu0 %v141
  %143 = vmatprep.subr.mxu0 0.0
  %v144 = vand.u32 %v53, 4294901760
  %145 = vmatpush1.msra.mxu0 %v144
  %146 = vmatprep.subr.mxu0 0.0
  %v147 = vand.u32 %v54, 4294901760
  %148 = vmatpush1.msra.mxu0 %v147
  %149 = vmatprep.subr.mxu0 0.0
  %v150 = vand.u32 %v55, 4294901760
  %151 = vmatpush1.msra.mxu0 %v150
  %v152 = vand.u32 %v22, 4294901760
  %v153 = vsub.f32 %v22, %v152
  %v154 = vand.u32 %v153, 4294901760
  %v155 = vsub.f32 %v153, %v154
  %v156 = vand.u32 %v155, 4294901760
  %157 = vmatprep.mubr.f32.mxu0 %v156
  %v158 = vand.u32 %v21, 4294901760
  %v159 = vsub.f32 %v21, %v158
  %v160 = vand.u32 %v159, 4294901760
  %v161 = vsub.f32 %v159, %v160
  %v162 = vand.u32 %v161, 4294901760
  %163 = vmatmul.mubr.f32.gmra.mrb[0].mxu0 %v162
  %v164 = vpop.f32.mrb[0].mxu0
  %v165 = vadd.f32 0.0, %v164
  %v166 = vpop.f32.mrb[0].mxu0
  %167 = vdwg.mxu0
  %168 = vmatprep.subr.mxu0 0.0
  %v169 = vand.u32 %v24, 4294901760
  %v170 = vsub.f32 %v24, %v169
  %v171 = vand.u32 %v170, 4294901760
  %v172 = vsub.f32 %v170, %v171
  %v173 = vand.u32 %v172, 4294901760
  %174 = vmatpush1.msra.mxu0 %v173
  %175 = vmatprep.subr.mxu0 0.0
  %v176 = vand.u32 %v25, 4294901760
  %v177 = vsub.f32 %v25, %v176
  %v178 = vand.u32 %v177, 4294901760
  %v179 = vsub.f32 %v177, %v178
  %v180 = vand.u32 %v179, 4294901760
  %181 = vmatpush1.msra.mxu0 %v180
  %182 = vmatprep.subr.mxu0 0.0
  %v183 = vand.u32 %v26, 4294901760
  %v184 = vsub.f32 %v26, %v183
  %v185 = vand.u32 %v184, 4294901760
  %v186 = vsub.f32 %v184, %v185
  %v187 = vand.u32 %v186, 4294901760
  %188 = vmatpush1.msra.mxu0 %v187
  %189 = vmatprep.subr.mxu0 0.0
  %v190 = vand.u32 %v27, 4294901760
  %v191 = vsub.f32 %v27, %v190
  %v192 = vand.u32 %v191, 4294901760
  %v193 = vsub.f32 %v191, %v192
  %v194 = vand.u32 %v193, 4294901760
  %195 = vmatpush1.msra.mxu0 %v194
  %196 = vmatprep.subr.mxu0 0.0
  %v197 = vand.u32 %v28, 4294901760
  %v198 = vsub.f32 %v28, %v197
  %v199 = vand.u32 %v198, 4294901760
  %v200 = vsub.f32 %v198, %v199
  %v201 = vand.u32 %v200, 4294901760
  %202 = vmatpush1.msra.mxu0 %v201
  %203 = vmatprep.subr.mxu0 0.0
  %v204 = vand.u32 %v29, 4294901760
  %v205 = vsub.f32 %v29, %v204
  %v206 = vand.u32 %v205, 4294901760
  %v207 = vsub.f32 %v205, %v206
  %v208 = vand.u32 %v207, 4294901760
  %209 = vmatpush1.msra.mxu0 %v208
  %210 = vmatprep.subr.mxu0 0.0
  %v211 = vand.u32 %v30, 4294901760
  %v212 = vsub.f32 %v30, %v211
  %v213 = vand.u32 %v212, 4294901760
  %v214 = vsub.f32 %v212, %v213
  %v215 = vand.u32 %v214, 4294901760
  %216 = vmatpush1.msra.mxu0 %v215
  %217 = vmatprep.subr.mxu0 0.0
  %v218 = vand.u32 %v31, 4294901760
  %v219 = vsub.f32 %v31, %v218
  %v220 = vand.u32 %v219, 4294901760
  %v221 = vsub.f32 %v219, %v220
  %v222 = vand.u32 %v221, 4294901760
  %223 = vmatpush1.msra.mxu0 %v222
  %224 = vmatprep.subr.mxu0 0.0
  %v225 = vand.u32 %v32, 4294901760
  %v226 = vsub.f32 %v32, %v225
  %v227 = vand.u32 %v226, 4294901760
  %v228 = vsub.f32 %v226, %v227
  %v229 = vand.u32 %v228, 4294901760
  %230 = vmatpush1.msra.mxu0 %v229
  %231 = vmatprep.subr.mxu0 0.0
  %v232 = vand.u32 %v33, 4294901760
  %v233 = vsub.f32 %v33, %v232
  %v234 = vand.u32 %v233, 4294901760
  %v235 = vsub.f32 %v233, %v234
  %v236 = vand.u32 %v235, 4294901760
  %237 = vmatpush1.msra.mxu0 %v236
  %238 = vmatprep.subr.mxu0 0.0
  %v239 = vand.u32 %v34, 4294901760
  %v240 = vsub.f32 %v34, %v239
  %v241 = vand.u32 %v240, 4294901760
  %v242 = vsub.f32 %v240, %v241
  %v243 = vand.u32 %v242, 4294901760
  %244 = vmatpush1.msra.mxu0 %v243
  %245 = vmatprep.subr.mxu0 0.0
  %v246 = vand.u32 %v35, 4294901760
  %v247 = vsub.f32 %v35, %v246
  %v248 = vand.u32 %v247, 4294901760
  %v249 = vsub.f32 %v247, %v248
  %v250 = vand.u32 %v249, 4294901760
  %251 = vmatpush1.msra.mxu0 %v250
  %252 = vmatprep.subr.mxu0 0.0
  %v253 = vand.u32 %v36, 4294901760
  %v254 = vsub.f32 %v36, %v253
  %v255 = vand.u32 %v254, 4294901760
  %v256 = vsub.f32 %v254, %v255
  %v257 = vand.u32 %v256, 4294901760
  %258 = vmatpush1.msra.mxu0 %v257
  %259 = vmatprep.subr.mxu0 0.0
  %v260 = vand.u32 %v37, 4294901760
  %v261 = vsub.f32 %v37, %v260
  %v262 = vand.u32 %v261, 4294901760
  %v263 = vsub.f32 %v261, %v262
  %v264 = vand.u32 %v263, 4294901760
  %265 = vmatpush1.msra.mxu0 %v264
  %266 = vmatprep.subr.mxu0 0.0
  %v267 = vand.u32 %v38, 4294901760
  %v268 = vsub.f32 %v38, %v267
  %v269 = vand.u32 %v268, 4294901760
  %v270 = vsub.f32 %v268, %v269
  %v271 = vand.u32 %v270, 4294901760
  %272 = vmatpush1.msra.mxu0 %v271
  %273 = vmatprep.subr.mxu0 0.0
  %v274 = vand.u32 %v39, 4294901760
  %v275 = vsub.f32 %v39, %v274
  %v276 = vand.u32 %v275, 4294901760
  %v277 = vsub.f32 %v275, %v276
  %v278 = vand.u32 %v277, 4294901760
  %279 = vmatpush1.msra.mxu0 %v278
  %280 = vmatprep.subr.mxu0 0.0
  %v281 = vand.u32 %v40, 4294901760
  %v282 = vsub.f32 %v40, %v281
  %v283 = vand.u32 %v282, 4294901760
  %v284 = vsub.f32 %v282, %v283
  %v285 = vand.u32 %v284, 4294901760
  %286 = vmatpush1.msra.mxu0 %v285
  %287 = vmatprep.subr.mxu0 0.0
  %v288 = vand.u32 %v41, 4294901760
  %v289 = vsub.f32 %v41, %v288
  %v290 = vand.u32 %v289, 4294901760
  %v291 = vsub.f32 %v289, %v290
  %v292 = vand.u32 %v291, 4294901760
  %293 = vmatpush1.msra.mxu0 %v292
  %294 = vmatprep.subr.mxu0 0.0
  %v295 = vand.u32 %v42, 4294901760
  %v296 = vsub.f32 %v42, %v295
  %v297 = vand.u32 %v296, 4294901760
  %v298 = vsub.f32 %v296, %v297
  %v299 = vand.u32 %v298, 4294901760
  %300 = vmatpush1.msra.mxu0 %v299
  %301 = vmatprep.subr.mxu0 0.0
  %v302 = vand.u32 %v43, 4294901760
  %v303 = vsub.f32 %v43, %v302
  %v304 = vand.u32 %v303, 4294901760
  %v305 = vsub.f32 %v303, %v304
  %v306 = vand.u32 %v305, 4294901760
  %307 = vmatpush1.msra.mxu0 %v306
  %308 = vmatprep.subr.mxu0 0.0
  %v309 = vand.u32 %v44, 4294901760
  %v310 = vsub.f32 %v44, %v309
  %v311 = vand.u32 %v310, 4294901760
  %v312 = vsub.f32 %v310, %v311
  %v313 = vand.u32 %v312, 4294901760
  %314 = vmatpush1.msra.mxu0 %v313
  %315 = vmatprep.subr.mxu0 0.0
  %v316 = vand.u32 %v45, 4294901760
  %v317 = vsub.f32 %v45, %v316
  %v318 = vand.u32 %v317, 4294901760
  %v319 = vsub.f32 %v317, %v318
  %v320 = vand.u32 %v319, 4294901760
  %321 = vmatpush1.msra.mxu0 %v320
  %322 = vmatprep.subr.mxu0 0.0
  %v323 = vand.u32 %v46, 4294901760
  %v324 = vsub.f32 %v46, %v323
  %v325 = vand.u32 %v324, 4294901760
  %v326 = vsub.f32 %v324, %v325
  %v327 = vand.u32 %v326, 4294901760
  %328 = vmatpush1.msra.mxu0 %v327
  %329 = vmatprep.subr.mxu0 0.0
  %v330 = vand.u32 %v47, 4294901760
  %v331 = vsub.f32 %v47, %v330
  %v332 = vand.u32 %v331, 4294901760
  %v333 = vsub.f32 %v331, %v332
  %v334 = vand.u32 %v333, 4294901760
  %335 = vmatpush1.msra.mxu0 %v334
  %336 = vmatprep.subr.mxu0 0.0
  %v337 = vand.u32 %v48, 4294901760
  %v338 = vsub.f32 %v48, %v337
  %v339 = vand.u32 %v338, 4294901760
  %v340 = vsub.f32 %v338, %v339
  %v341 = vand.u32 %v340, 4294901760
  %342 = vmatpush1.msra.mxu0 %v341
  %343 = vmatprep.subr.mxu0 0.0
  %v344 = vand.u32 %v49, 4294901760
  %v345 = vsub.f32 %v49, %v344
  %v346 = vand.u32 %v345, 4294901760
  %v347 = vsub.f32 %v345, %v346
  %v348 = vand.u32 %v347, 4294901760
  %349 = vmatpush1.msra.mxu0 %v348
  %350 = vmatprep.subr.mxu0 0.0
  %v351 = vand.u32 %v50, 4294901760
  %v352 = vsub.f32 %v50, %v351
  %v353 = vand.u32 %v352, 4294901760
  %v354 = vsub.f32 %v352, %v353
  %v355 = vand.u32 %v354, 4294901760
  %356 = vmatpush1.msra.mxu0 %v355
  %357 = vmatprep.subr.mxu0 0.0
  %v358 = vand.u32 %v51, 4294901760
  %v359 = vsub.f32 %v51, %v358
  %v360 = vand.u32 %v359, 4294901760
  %v361 = vsub.f32 %v359, %v360
  %v362 = vand.u32 %v361, 4294901760
  %363 = vmatpush1.msra.mxu0 %v362
  %364 = vmatprep.subr.mxu0 0.0
  %v365 = vand.u32 %v52, 4294901760
  %v366 = vsub.f32 %v52, %v365
  %v367 = vand.u32 %v366, 4294901760
  %v368 = vsub.f32 %v366, %v367
  %v369 = vand.u32 %v368, 4294901760
  %370 = vmatpush1.msra.mxu0 %v369
  %371 = vmatprep.subr.mxu0 0.0
  %v372 = vand.u32 %v53, 4294901760
  %v373 = vsub.f32 %v53, %v372
  %v374 = vand.u32 %v373, 4294901760
  %v375 = vsub.f32 %v373, %v374
  %v376 = vand.u32 %v375, 4294901760
  %377 = vmatpush1.msra.mxu0 %v376
  %378 = vmatprep.subr.mxu0 0.0
  %v379 = vand.u32 %v54, 4294901760
  %v380 = vsub.f32 %v54, %v379
  %v381 = vand.u32 %v380, 4294901760
  %v382 = vsub.f32 %v380, %v381
  %v383 = vand.u32 %v382, 4294901760
  %384 = vmatpush1.msra.mxu0 %v383
  %385 = vmatprep.subr.mxu0 0.0
  %v386 = vand.u32 %v55, 4294901760
  %v387 = vsub.f32 %v55, %v386
  %v388 = vand.u32 %v387, 4294901760
  %v389 = vsub.f32 %v387, %v388
  %v390 = vand.u32 %v389, 4294901760
  %391 = vmatpush1.msra.mxu0 %v390
  %v392 = vand.u32 %v22, 4294901760
  %393 = vmatprep.mubr.f32.mxu0 %v392
  %v394 = vand.u32 %v21, 4294901760
  %395 = vmatmul.mubr.f32.gmra.mrb[0].mxu0 %v394
  %v396 = vpop.f32.mrb[0].mxu0
  %v397 = vadd.f32 %v165, %v396
  %v398 = vpop.f32.mrb[0].mxu0
  %399 = vdwg.mxu0
  %400 = vmatprep.subr.mxu0 0.0
  %v401 = vand.u32 %v24, 4294901760
  %v402 = vsub.f32 %v24, %v401
  %403 = vmatpush1.msra.mxu0 %v402
  %404 = vmatprep.subr.mxu0 0.0
  %v405 = vand.u32 %v25, 4294901760
  %v406 = vsub.f32 %v25, %v405
  %407 = vmatpush1.msra.mxu0 %v406
  %408 = vmatprep.subr.mxu0 0.0
  %v409 = vand.u32 %v26, 4294901760
  %v410 = vsub.f32 %v26, %v409
  %411 = vmatpush1.msra.mxu0 %v410
  %412 = vmatprep.subr.mxu0 0.0
  %v413 = vand.u32 %v27, 4294901760
  %v414 = vsub.f32 %v27, %v413
  %415 = vmatpush1.msra.mxu0 %v414
  %416 = vmatprep.subr.mxu0 0.0
  %v417 = vand.u32 %v28, 4294901760
  %v418 = vsub.f32 %v28, %v417
  %419 = vmatpush1.msra.mxu0 %v418
  %420 = vmatprep.subr.mxu0 0.0
  %v421 = vand.u32 %v29, 4294901760
  %v422 = vsub.f32 %v29, %v421
  %423 = vmatpush1.msra.mxu0 %v422
  %424 = vmatprep.subr.mxu0 0.0
  %v425 = vand.u32 %v30, 4294901760
  %v426 = vsub.f32 %v30, %v425
  %427 = vmatpush1.msra.mxu0 %v426
  %428 = vmatprep.subr.mxu0 0.0
  %v429 = vand.u32 %v31, 4294901760
  %v430 = vsub.f32 %v31, %v429
  %431 = vmatpush1.msra.mxu0 %v430
  %432 = vmatprep.subr.mxu0 0.0
  %v433 = vand.u32 %v32, 4294901760
  %v434 = vsub.f32 %v32, %v433
  %435 = vmatpush1.msra.mxu0 %v434
  %436 = vmatprep.subr.mxu0 0.0
  %v437 = vand.u32 %v33, 4294901760
  %v438 = vsub.f32 %v33, %v437
  %439 = vmatpush1.msra.mxu0 %v438
  %440 = vmatprep.subr.mxu0 0.0
  %v441 = vand.u32 %v34, 4294901760
  %v442 = vsub.f32 %v34, %v441
  %443 = vmatpush1.msra.mxu0 %v442
  %444 = vmatprep.subr.mxu0 0.0
  %v445 = vand.u32 %v35, 4294901760
  %v446 = vsub.f32 %v35, %v445
  %447 = vmatpush1.msra.mxu0 %v446
  %448 = vmatprep.subr.mxu0 0.0
  %v449 = vand.u32 %v36, 4294901760
  %v450 = vsub.f32 %v36, %v449
  %451 = vmatpush1.msra.mxu0 %v450
  %452 = vmatprep.subr.mxu0 0.0
  %v453 = vand.u32 %v37, 4294901760
  %v454 = vsub.f32 %v37, %v453
  %455 = vmatpush1.msra.mxu0 %v454
  %456 = vmatprep.subr.mxu0 0.0
  %v457 = vand.u32 %v38, 4294901760
  %v458 = vsub.f32 %v38, %v457
  %459 = vmatpush1.msra.mxu0 %v458
  %460 = vmatprep.subr.mxu0 0.0
  %v461 = vand.u32 %v39, 4294901760
  %v462 = vsub.f32 %v39, %v461
  %463 = vmatpush1.msra.mxu0 %v462
  %464 = vmatprep.subr.mxu0 0.0
  %v465 = vand.u32 %v40, 4294901760
  %v466 = vsub.f32 %v40, %v465
  %467 = vmatpush1.msra.mxu0 %v466
  %468 = vmatprep.subr.mxu0 0.0
  %v469 = vand.u32 %v41, 4294901760
  %v470 = vsub.f32 %v41, %v469
  %471 = vmatpush1.msra.mxu0 %v470
  %472 = vmatprep.subr.mxu0 0.0
  %v473 = vand.u32 %v42, 4294901760
  %v474 = vsub.f32 %v42, %v473
  %475 = vmatpush1.msra.mxu0 %v474
  %476 = vmatprep.subr.mxu0 0.0
  %v477 = vand.u32 %v43, 4294901760
  %v478 = vsub.f32 %v43, %v477
  %479 = vmatpush1.msra.mxu0 %v478
  %480 = vmatprep.subr.mxu0 0.0
  %v481 = vand.u32 %v44, 4294901760
  %v482 = vsub.f32 %v44, %v481
  %483 = vmatpush1.msra.mxu0 %v482
  %484 = vmatprep.subr.mxu0 0.0
  %v485 = vand.u32 %v45, 4294901760
  %v486 = vsub.f32 %v45, %v485
  %487 = vmatpush1.msra.mxu0 %v486
  %488 = vmatprep.subr.mxu0 0.0
  %v489 = vand.u32 %v46, 4294901760
  %v490 = vsub.f32 %v46, %v489
  %491 = vmatpush1.msra.mxu0 %v490
  %492 = vmatprep.subr.mxu0 0.0
  %v493 = vand.u32 %v47, 4294901760
  %v494 = vsub.f32 %v47, %v493
  %495 = vmatpush1.msra.mxu0 %v494
  %496 = vmatprep.subr.mxu0 0.0
  %v497 = vand.u32 %v48, 4294901760
  %v498 = vsub.f32 %v48, %v497
  %499 = vmatpush1.msra.mxu0 %v498
  %500 = vmatprep.subr.mxu0 0.0
  %v501 = vand.u32 %v49, 4294901760
  %v502 = vsub.f32 %v49, %v501
  %503 = vmatpush1.msra.mxu0 %v502
  %504 = vmatprep.subr.mxu0 0.0
  %v505 = vand.u32 %v50, 4294901760
  %v506 = vsub.f32 %v50, %v505
  %507 = vmatpush1.msra.mxu0 %v506
  %508 = vmatprep.subr.mxu0 0.0
  %v509 = vand.u32 %v51, 4294901760
  %v510 = vsub.f32 %v51, %v509
  %511 = vmatpush1.msra.mxu0 %v510
  %512 = vmatprep.subr.mxu0 0.0
  %v513 = vand.u32 %v52, 4294901760
  %v514 = vsub.f32 %v52, %v513
  %515 = vmatpush1.msra.mxu0 %v514
  %516 = vmatprep.subr.mxu0 0.0
  %v517 = vand.u32 %v53, 4294901760
  %v518 = vsub.f32 %v53, %v517
  %519 = vmatpush1.msra.mxu0 %v518
  %520 = vmatprep.subr.mxu0 0.0
  %v521 = vand.u32 %v54, 4294901760
  %v522 = vsub.f32 %v54, %v521
  %523 = vmatpush1.msra.mxu0 %v522
  %524 = vmatprep.subr.mxu0 0.0
  %v525 = vand.u32 %v55, 4294901760
  %v526 = vsub.f32 %v55, %v525
  %527 = vmatpush1.msra.mxu0 %v526
  %v528 = vand.u32 %v22, 4294901760
  %v529 = vsub.f32 %v22, %v528
  %530 = vmatprep.mubr.f32.mxu0 %v529
  %v531 = vand.u32 %v21, 4294901760
  %v532 = vsub.f32 %v21, %v531
  %533 = vmatmul.mubr.f32.gmra.mrb[0].mxu0 %v532
  %v534 = vpop.f32.mrb[0].mxu0
  %v535 = vadd.f32 %v397, %v534
  %v536 = vpop.f32.mrb[0].mxu0
  %537 = vdwg.mxu0
  %538 = vmatprep.subr.mxu0 0.0
  %v539 = vand.u32 %v24, 4294901760
  %540 = vmatpush1.msra.mxu0 %v539
  %541 = vmatprep.subr.mxu0 0.0
  %v542 = vand.u32 %v25, 4294901760
  %543 = vmatpush1.msra.mxu0 %v542
  %544 = vmatprep.subr.mxu0 0.0
  %v545 = vand.u32 %v26, 4294901760
  %546 = vmatpush1.msra.mxu0 %v545
  %547 = vmatprep.subr.mxu0 0.0
  %v548 = vand.u32 %v27, 4294901760
  %549 = vmatpush1.msra.mxu0 %v548
  %550 = vmatprep.subr.mxu0 0.0
  %v551 = vand.u32 %v28, 4294901760
  %552 = vmatpush1.msra.mxu0 %v551
  %553 = vmatprep.subr.mxu0 0.0
  %v554 = vand.u32 %v29, 4294901760
  %555 = vmatpush1.msra.mxu0 %v554
  %556 = vmatprep.subr.mxu0 0.0
  %v557 = vand.u32 %v30, 4294901760
  %558 = vmatpush1.msra.mxu0 %v557
  %559 = vmatprep.subr.mxu0 0.0
  %v560 = vand.u32 %v31, 4294901760
  %561 = vmatpush1.msra.mxu0 %v560
  %562 = vmatprep.subr.mxu0 0.0
  %v563 = vand.u32 %v32, 4294901760
  %564 = vmatpush1.msra.mxu0 %v563
  %565 = vmatprep.subr.mxu0 0.0
  %v566 = vand.u32 %v33, 4294901760
  %567 = vmatpush1.msra.mxu0 %v566
  %568 = vmatprep.subr.mxu0 0.0
  %v569 = vand.u32 %v34, 4294901760
  %570 = vmatpush1.msra.mxu0 %v569
  %571 = vmatprep.subr.mxu0 0.0
  %v572 = vand.u32 %v35, 4294901760
  %573 = vmatpush1.msra.mxu0 %v572
  %574 = vmatprep.subr.mxu0 0.0
  %v575 = vand.u32 %v36, 4294901760
  %576 = vmatpush1.msra.mxu0 %v575
  %577 = vmatprep.subr.mxu0 0.0
  %v578 = vand.u32 %v37, 4294901760
  %579 = vmatpush1.msra.mxu0 %v578
  %580 = vmatprep.subr.mxu0 0.0
  %v581 = vand.u32 %v38, 4294901760
  %582 = vmatpush1.msra.mxu0 %v581
  %583 = vmatprep.subr.mxu0 0.0
  %v584 = vand.u32 %v39, 4294901760
  %585 = vmatpush1.msra.mxu0 %v584
  %586 = vmatprep.subr.mxu0 0.0
  %v587 = vand.u32 %v40, 4294901760
  %588 = vmatpush1.msra.mxu0 %v587
  %589 = vmatprep.subr.mxu0 0.0
  %v590 = vand.u32 %v41, 4294901760
  %591 = vmatpush1.msra.mxu0 %v590
  %592 = vmatprep.subr.mxu0 0.0
  %v593 = vand.u32 %v42, 4294901760
  %594 = vmatpush1.msra.mxu0 %v593
  %595 = vmatprep.subr.mxu0 0.0
  %v596 = vand.u32 %v43, 4294901760
  %597 = vmatpush1.msra.mxu0 %v596
  %598 = vmatprep.subr.mxu0 0.0
  %v599 = vand.u32 %v44, 4294901760
  %600 = vmatpush1.msra.mxu0 %v599
  %601 = vmatprep.subr.mxu0 0.0
  %v602 = vand.u32 %v45, 4294901760
  %603 = vmatpush1.msra.mxu0 %v602
  %604 = vmatprep.subr.mxu0 0.0
  %v605 = vand.u32 %v46, 4294901760
  %606 = vmatpush1.msra.mxu0 %v605
  %607 = vmatprep.subr.mxu0 0.0
  %v608 = vand.u32 %v47, 4294901760
  %609 = vmatpush1.msra.mxu0 %v608
  %610 = vmatprep.subr.mxu0 0.0
  %v611 = vand.u32 %v48, 4294901760
  %612 = vmatpush1.msra.mxu0 %v611
  %613 = vmatprep.subr.mxu0 0.0
  %v614 = vand.u32 %v49, 4294901760
  %615 = vmatpush1.msra.mxu0 %v614
  %616 = vmatprep.subr.mxu0 0.0
  %v617 = vand.u32 %v50, 4294901760
  %618 = vmatpush1.msra.mxu0 %v617
  %619 = vmatprep.subr.mxu0 0.0
  %v620 = vand.u32 %v51, 4294901760
  %621 = vmatpush1.msra.mxu0 %v620
  %622 = vmatprep.subr.mxu0 0.0
  %v623 = vand.u32 %v52, 4294901760
  %624 = vmatpush1.msra.mxu0 %v623
  %625 = vmatprep.subr.mxu0 0.0
  %v626 = vand.u32 %v53, 4294901760
  %627 = vmatpush1.msra.mxu0 %v626
  %628 = vmatprep.subr.mxu0 0.0
  %v629 = vand.u32 %v54, 4294901760
  %630 = vmatpush1.msra.mxu0 %v629
  %631 = vmatprep.subr.mxu0 0.0
  %v632 = vand.u32 %v55, 4294901760
  %633 = vmatpush1.msra.mxu0 %v632
  %v634 = vand.u32 %v22, 4294901760
  %v635 = vsub.f32 %v22, %v634
  %v636 = vand.u32 %v635, 4294901760
  %637 = vmatprep.mubr.f32.mxu0 %v636
  %v638 = vand.u32 %v21, 4294901760
  %v639 = vsub.f32 %v21, %v638
  %v640 = vand.u32 %v639, 4294901760
  %641 = vmatmul.mubr.f32.gmra.mrb[0].mxu0 %v640
  %v642 = vpop.f32.mrb[0].mxu0
  %v643 = vadd.f32 %v535, %v642
  %v644 = vpop.f32.mrb[0].mxu0
  %645 = vdwg.mxu0
  %646 = vmatprep.subr.mxu0 0.0
  %v647 = vand.u32 %v24, 4294901760
  %v648 = vsub.f32 %v24, %v647
  %v649 = vand.u32 %v648, 4294901760
  %650 = vmatpush1.msra.mxu0 %v649
  %651 = vmatprep.subr.mxu0 0.0
  %v652 = vand.u32 %v25, 4294901760
  %v653 = vsub.f32 %v25, %v652
  %v654 = vand.u32 %v653, 4294901760
  %655 = vmatpush1.msra.mxu0 %v654
  %656 = vmatprep.subr.mxu0 0.0
  %v657 = vand.u32 %v26, 4294901760
  %v658 = vsub.f32 %v26, %v657
  %v659 = vand.u32 %v658, 4294901760
  %660 = vmatpush1.msra.mxu0 %v659
  %661 = vmatprep.subr.mxu0 0.0
  %v662 = vand.u32 %v27, 4294901760
  %v663 = vsub.f32 %v27, %v662
  %v664 = vand.u32 %v663, 4294901760
  %665 = vmatpush1.msra.mxu0 %v664
  %666 = vmatprep.subr.mxu0 0.0
  %v667 = vand.u32 %v28, 4294901760
  %v668 = vsub.f32 %v28, %v667
  %v669 = vand.u32 %v668, 4294901760
  %670 = vmatpush1.msra.mxu0 %v669
  %671 = vmatprep.subr.mxu0 0.0
  %v672 = vand.u32 %v29, 4294901760
  %v673 = vsub.f32 %v29, %v672
  %v674 = vand.u32 %v673, 4294901760
  %675 = vmatpush1.msra.mxu0 %v674
  %676 = vmatprep.subr.mxu0 0.0
  %v677 = vand.u32 %v30, 4294901760
  %v678 = vsub.f32 %v30, %v677
  %v679 = vand.u32 %v678, 4294901760
  %680 = vmatpush1.msra.mxu0 %v679
  %681 = vmatprep.subr.mxu0 0.0
  %v682 = vand.u32 %v31, 4294901760
  %v683 = vsub.f32 %v31, %v682
  %v684 = vand.u32 %v683, 4294901760
  %685 = vmatpush1.msra.mxu0 %v684
  %686 = vmatprep.subr.mxu0 0.0
  %v687 = vand.u32 %v32, 4294901760
  %v688 = vsub.f32 %v32, %v687
  %v689 = vand.u32 %v688, 4294901760
  %690 = vmatpush1.msra.mxu0 %v689
  %691 = vmatprep.subr.mxu0 0.0
  %v692 = vand.u32 %v33, 4294901760
  %v693 = vsub.f32 %v33, %v692
  %v694 = vand.u32 %v693, 4294901760
  %695 = vmatpush1.msra.mxu0 %v694
  %696 = vmatprep.subr.mxu0 0.0
  %v697 = vand.u32 %v34, 4294901760
  %v698 = vsub.f32 %v34, %v697
  %v699 = vand.u32 %v698, 4294901760
  %700 = vmatpush1.msra.mxu0 %v699
  %701 = vmatprep.subr.mxu0 0.0
  %v702 = vand.u32 %v35, 4294901760
  %v703 = vsub.f32 %v35, %v702
  %v704 = vand.u32 %v703, 4294901760
  %705 = vmatpush1.msra.mxu0 %v704
  %706 = vmatprep.subr.mxu0 0.0
  %v707 = vand.u32 %v36, 4294901760
  %v708 = vsub.f32 %v36, %v707
  %v709 = vand.u32 %v708, 4294901760
  %710 = vmatpush1.msra.mxu0 %v709
  %711 = vmatprep.subr.mxu0 0.0
  %v712 = vand.u32 %v37, 4294901760
  %v713 = vsub.f32 %v37, %v712
  %v714 = vand.u32 %v713, 4294901760
  %715 = vmatpush1.msra.mxu0 %v714
  %716 = vmatprep.subr.mxu0 0.0
  %v717 = vand.u32 %v38, 4294901760
  %v718 = vsub.f32 %v38, %v717
  %v719 = vand.u32 %v718, 4294901760
  %720 = vmatpush1.msra.mxu0 %v719
  %721 = vmatprep.subr.mxu0 0.0
  %v722 = vand.u32 %v39, 4294901760
  %v723 = vsub.f32 %v39, %v722
  %v724 = vand.u32 %v723, 4294901760
  %725 = vmatpush1.msra.mxu0 %v724
  %726 = vmatprep.subr.mxu0 0.0
  %v727 = vand.u32 %v40, 4294901760
  %v728 = vsub.f32 %v40, %v727
  %v729 = vand.u32 %v728, 4294901760
  %730 = vmatpush1.msra.mxu0 %v729
  %731 = vmatprep.subr.mxu0 0.0
  %v732 = vand.u32 %v41, 4294901760
  %v733 = vsub.f32 %v41, %v732
  %v734 = vand.u32 %v733, 4294901760
  %735 = vmatpush1.msra.mxu0 %v734
  %736 = vmatprep.subr.mxu0 0.0
  %v737 = vand.u32 %v42, 4294901760
  %v738 = vsub.f32 %v42, %v737
  %v739 = vand.u32 %v738, 4294901760
  %740 = vmatpush1.msra.mxu0 %v739
  %741 = vmatprep.subr.mxu0 0.0
  %v742 = vand.u32 %v43, 4294901760
  %v743 = vsub.f32 %v43, %v742
  %v744 = vand.u32 %v743, 4294901760
  %745 = vmatpush1.msra.mxu0 %v744
  %746 = vmatprep.subr.mxu0 0.0
  %v747 = vand.u32 %v44, 4294901760
  %v748 = vsub.f32 %v44, %v747
  %v749 = vand.u32 %v748, 4294901760
  %750 = vmatpush1.msra.mxu0 %v749
  %751 = vmatprep.subr.mxu0 0.0
  %v752 = vand.u32 %v45, 4294901760
  %v753 = vsub.f32 %v45, %v752
  %v754 = vand.u32 %v753, 4294901760
  %755 = vmatpush1.msra.mxu0 %v754
  %756 = vmatprep.subr.mxu0 0.0
  %v757 = vand.u32 %v46, 4294901760
  %v758 = vsub.f32 %v46, %v757
  %v759 = vand.u32 %v758, 4294901760
  %760 = vmatpush1.msra.mxu0 %v759
  %761 = vmatprep.subr.mxu0 0.0
  %v762 = vand.u32 %v47, 4294901760
  %v763 = vsub.f32 %v47, %v762
  %v764 = vand.u32 %v763, 4294901760
  %765 = vmatpush1.msra.mxu0 %v764
  %766 = vmatprep.subr.mxu0 0.0
  %v767 = vand.u32 %v48, 4294901760
  %v768 = vsub.f32 %v48, %v767
  %v769 = vand.u32 %v768, 4294901760
  %770 = vmatpush1.msra.mxu0 %v769
  %771 = vmatprep.subr.mxu0 0.0
  %v772 = vand.u32 %v49, 4294901760
  %v773 = vsub.f32 %v49, %v772
  %v774 = vand.u32 %v773, 4294901760
  %775 = vmatpush1.msra.mxu0 %v774
  %776 = vmatprep.subr.mxu0 0.0
  %v777 = vand.u32 %v50, 4294901760
  %v778 = vsub.f32 %v50, %v777
  %v779 = vand.u32 %v778, 4294901760
  %780 = vmatpush1.msra.mxu0 %v779
  %781 = vmatprep.subr.mxu0 0.0
  %v782 = vand.u32 %v51, 4294901760
  %v783 = vsub.f32 %v51, %v782
  %v784 = vand.u32 %v783, 4294901760
  %785 = vmatpush1.msra.mxu0 %v784
  %786 = vmatprep.subr.mxu0 0.0
  %v787 = vand.u32 %v52, 4294901760
  %v788 = vsub.f32 %v52, %v787
  %v789 = vand.u32 %v788, 4294901760
  %790 = vmatpush1.msra.mxu0 %v789
  %791 = vmatprep.subr.mxu0 0.0
  %v792 = vand.u32 %v53, 4294901760
  %v793 = vsub.f32 %v53, %v792
  %v794 = vand.u32 %v793, 4294901760
  %795 = vmatpush1.msra.mxu0 %v794
  %796 = vmatprep.subr.mxu0 0.0
  %v797 = vand.u32 %v54, 4294901760
  %v798 = vsub.f32 %v54, %v797
  %v799 = vand.u32 %v798, 4294901760
  %800 = vmatpush1.msra.mxu0 %v799
  %801 = vmatprep.subr.mxu0 0.0
  %v802 = vand.u32 %v55, 4294901760
  %v803 = vsub.f32 %v55, %v802
  %v804 = vand.u32 %v803, 4294901760
  %805 = vmatpush1.msra.mxu0 %v804
  %v806 = vand.u32 %v22, 4294901760
  %807 = vmatprep.mubr.f32.mxu0 %v806
  %v808 = vand.u32 %v21, 4294901760
  %809 = vmatmul.mubr.f32.gmra.mrb[0].mxu0 %v808
  %v810 = vpop.f32.mrb[0].mxu0
  %v811 = vadd.f32 %v643, %v810
  %v812 = vpop.f32.mrb[0].mxu0
  %813 = vdwg.mxu0
  %814 = vmatprep.subr.mxu0 0.0
  %v815 = vand.u32 %v24, 4294901760
  %816 = vmatpush1.msra.mxu0 %v815
  %817 = vmatprep.subr.mxu0 0.0
  %v818 = vand.u32 %v25, 4294901760
  %819 = vmatpush1.msra.mxu0 %v818
  %820 = vmatprep.subr.mxu0 0.0
  %v821 = vand.u32 %v26, 4294901760
  %822 = vmatpush1.msra.mxu0 %v821
  %823 = vmatprep.subr.mxu0 0.0
  %v824 = vand.u32 %v27, 4294901760
  %825 = vmatpush1.msra.mxu0 %v824
  %826 = vmatprep.subr.mxu0 0.0
  %v827 = vand.u32 %v28, 4294901760
  %828 = vmatpush1.msra.mxu0 %v827
  %829 = vmatprep.subr.mxu0 0.0
  %v830 = vand.u32 %v29, 4294901760
  %831 = vmatpush1.msra.mxu0 %v830
  %832 = vmatprep.subr.mxu0 0.0
  %v833 = vand.u32 %v30, 4294901760
  %834 = vmatpush1.msra.mxu0 %v833
  %835 = vmatprep.subr.mxu0 0.0
  %v836 = vand.u32 %v31, 4294901760
  %837 = vmatpush1.msra.mxu0 %v836
  %838 = vmatprep.subr.mxu0 0.0
  %v839 = vand.u32 %v32, 4294901760
  %840 = vmatpush1.msra.mxu0 %v839
  %841 = vmatprep.subr.mxu0 0.0
  %v842 = vand.u32 %v33, 4294901760
  %843 = vmatpush1.msra.mxu0 %v842
  %844 = vmatprep.subr.mxu0 0.0
  %v845 = vand.u32 %v34, 4294901760
  %846 = vmatpush1.msra.mxu0 %v845
  %847 = vmatprep.subr.mxu0 0.0
  %v848 = vand.u32 %v35, 4294901760
  %849 = vmatpush1.msra.mxu0 %v848
  %850 = vmatprep.subr.mxu0 0.0
  %v851 = vand.u32 %v36, 4294901760
  %852 = vmatpush1.msra.mxu0 %v851
  %853 = vmatprep.subr.mxu0 0.0
  %v854 = vand.u32 %v37, 4294901760
  %855 = vmatpush1.msra.mxu0 %v854
  %856 = vmatprep.subr.mxu0 0.0
  %v857 = vand.u32 %v38, 4294901760
  %858 = vmatpush1.msra.mxu0 %v857
  %859 = vmatprep.subr.mxu0 0.0
  %v860 = vand.u32 %v39, 4294901760
  %861 = vmatpush1.msra.mxu0 %v860
  %862 = vmatprep.subr.mxu0 0.0
  %v863 = vand.u32 %v40, 4294901760
  %864 = vmatpush1.msra.mxu0 %v863
  %865 = vmatprep.subr.mxu0 0.0
  %v866 = vand.u32 %v41, 4294901760
  %867 = vmatpush1.msra.mxu0 %v866
  %868 = vmatprep.subr.mxu0 0.0
  %v869 = vand.u32 %v42, 4294901760
  %870 = vmatpush1.msra.mxu0 %v869
  %871 = vmatprep.subr.mxu0 0.0
  %v872 = vand.u32 %v43, 4294901760
  %873 = vmatpush1.msra.mxu0 %v872
  %874 = vmatprep.subr.mxu0 0.0
  %v875 = vand.u32 %v44, 4294901760
  %876 = vmatpush1.msra.mxu0 %v875
  %877 = vmatprep.subr.mxu0 0.0
  %v878 = vand.u32 %v45, 4294901760
  %879 = vmatpush1.msra.mxu0 %v878
  %880 = vmatprep.subr.mxu0 0.0
  %v881 = vand.u32 %v46, 4294901760
  %882 = vmatpush1.msra.mxu0 %v881
  %883 = vmatprep.subr.mxu0 0.0
  %v884 = vand.u32 %v47, 4294901760
  %885 = vmatpush1.msra.mxu0 %v884
  %886 = vmatprep.subr.mxu0 0.0
  %v887 = vand.u32 %v48, 4294901760
  %888 = vmatpush1.msra.mxu0 %v887
  %889 = vmatprep.subr.mxu0 0.0
  %v890 = vand.u32 %v49, 4294901760
  %891 = vmatpush1.msra.mxu0 %v890
  %892 = vmatprep.subr.mxu0 0.0
  %v893 = vand.u32 %v50, 4294901760
  %894 = vmatpush1.msra.mxu0 %v893
  %895 = vmatprep.subr.mxu0 0.0
  %v896 = vand.u32 %v51, 4294901760
  %897 = vmatpush1.msra.mxu0 %v896
  %898 = vmatprep.subr.mxu0 0.0
  %v899 = vand.u32 %v52, 4294901760
  %900 = vmatpush1.msra.mxu0 %v899
  %901 = vmatprep.subr.mxu0 0.0
  %v902 = vand.u32 %v53, 4294901760
  %903 = vmatpush1.msra.mxu0 %v902
  %904 = vmatprep.subr.mxu0 0.0
  %v905 = vand.u32 %v54, 4294901760
  %906 = vmatpush1.msra.mxu0 %v905
  %907 = vmatprep.subr.mxu0 0.0
  %v908 = vand.u32 %v55, 4294901760
  %909 = vmatpush1.msra.mxu0 %v908
  %v910 = vand.u32 %v22, 4294901760
  %911 = vmatprep.mubr.f32.mxu0 %v910
  %v912 = vand.u32 %v21, 4294901760
  %913 = vmatmul.mubr.f32.gmra.mrb[0].mxu0 %v912
  %v914 = vpop.f32.mrb[0].mxu0
  %v915 = vadd.f32 %v811, %v914
  %v916 = vpop.f32.mrb[0].mxu0
  %917 = vdwg.mxu0
  %vm918 = vcmask 130048
  %v919 = vsel %vm918, %v915, -inf
  %920 = vmax.xlane.f32.xlu0 %v919
  %v921 = vpop.xlane.xlu0 %920
  %v922 = vsub.f32 %v915, %v921
  %v923 = vmul.f32 %v922, 1.442695
  %v924 = vpow.pop %v923
  %v925 = vsel %vm918, %v924, 0.0
  %926 = vadd.xlane.f32.xlu0 %v925
  %v927 = vpop.xlane.xlu0 %926
  %v928 = vrcp.pop %v927
  %v929 = vmul.f32 %v924, %v928
  %v930 = vld [vmem:[%s2] sm:$0xff]
  %v931 = vld [vmem:[%s2 + $0x8] sm:$0xff]
  %v932 = vld [vmem:[%s2 + $0x10] sm:$0xff]
  %v933 = vld [vmem:[%s2 + $0x18] sm:$0xff]
  %v935 = vsel %vm918, %v929, 0
  %v937 = vand.u32 %v931, 4294901760
  %938 = vmatprep.subr.mxu0 %v937
  %v939 = vand.u32 %v930, 4294901760
  %940 = vmatpush1.msra.mxu0 %v939
  %v941 = vand.u32 %v933, 4294901760
  %942 = vmatprep.subr.mxu0 %v941
  %v943 = vand.u32 %v932, 4294901760
  %944 = vmatpush1.msra.mxu0 %v943
  %945 = vmatprep.subr.mxu0 0.0
  %946 = vmatpush1.msra.mxu0 0.0
  %947 = vmatprep.subr.mxu0 0.0
  %948 = vmatpush1.msra.mxu0 0.0
  %949 = vmatprep.subr.mxu0 0.0
  %950 = vmatpush1.msra.mxu0 0.0
  %951 = vmatprep.subr.mxu0 0.0
  %952 = vmatpush1.msra.mxu0 0.0
  %953 = vmatprep.subr.mxu0 0.0
  %954 = vmatpush1.msra.mxu0 0.0
  %955 = vmatprep.subr.mxu0 0.0
  %956 = vmatpush1.msra.mxu0 0.0
  %957 = vmatprep.subr.mxu0 0.0
  %958 = vmatpush1.msra.mxu0 0.0
  %959 = vmatprep.subr.mxu0 0.0
  %960 = vmatpush1.msra.mxu0 0.0
  %961 = vmatprep.subr.mxu0 0.0
  %962 = vmatpush1.msra.mxu0 0.0
  %963 = vmatprep.subr.mxu0 0.0
  %964 = vmatpush1.msra.mxu0 0.0
  %965 = vmatprep.subr.mxu0 0.0
  %966 = vmatpush1.msra.mxu0 0.0
  %967 = vmatprep.subr.mxu0 0.0
  %968 = vmatpush1.msra.mxu0 0.0
  %969 = vmatprep.subr.mxu0 0.0
  %970 = vmatpush1.msra.mxu0 0.0
  %971 = vmatprep.subr.mxu0 0.0
  %972 = vmatpush1.msra.mxu0 0.0
  %973 = vmatprep.subr.mxu0 0.0
  %974 = vmatpush1.msra.mxu0 0.0
  %975 = vmatprep.subr.mxu0 0.0
  %976 = vmatpush1.msra.mxu0 0.0
  %977 = vmatprep.subr.mxu0 0.0
  %978 = vmatpush1.msra.mxu0 0.0
  %979 = vmatprep.subr.mxu0 0.0
  %980 = vmatpush1.msra.mxu0 0.0
  %981 = vmatprep.subr.mxu0 0.0
  %982 = vmatpush1.msra.mxu0 0.0
  %983 = vmatprep.subr.mxu0 0.0
  %984 = vmatpush1.msra.mxu0 0.0
  %985 = vmatprep.subr.mxu0 0.0
  %986 = vmatpush1.msra.mxu0 0.0
  %987 = vmatprep.subr.mxu0 0.0
  %988 = vmatpush1.msra.mxu0 0.0
  %989 = vmatprep.subr.mxu0 0.0
  %990 = vmatpush1.msra.mxu0 0.0
  %991 = vmatprep.subr.mxu0 0.0
  %992 = vmatpush1.msra.mxu0 0.0
  %993 = vmatprep.subr.mxu0 0.0
  %994 = vmatpush1.msra.mxu0 0.0
  %995 = vmatprep.subr.mxu0 0.0
  %996 = vmatpush1.msra.mxu0 0.0
  %997 = vmatprep.subr.mxu0 0.0
  %998 = vmatpush1.msra.mxu0 0.0
  %999 = vmatprep.subr.mxu0 0.0
  %1000 = vmatpush1.msra.mxu0 0.0
  %1001 = vmatprep.subr.mxu0 0.0
  %1002 = vmatpush1.msra.mxu0 0.0
  %1003 = vmatprep.subr.mxu0 0.0
  %1004 = vmatpush1.msra.mxu0 0.0
  %1005 = vmatprep.mubr.f32.mxu0 0.0
  %v1006 = vand.u32 %v935, 4294901760
  %v1007 = vsub.f32 %v935, %v1006
  %v1008 = vand.u32 %v1007, 4294901760
  %v1009 = vsub.f32 %v1007, %v1008
  %v1010 = vand.u32 %v1009, 4294901760
  %1011 = vmatmul.mubr.f32.gmra.mrb[0].mxu0 %v1010
  %v1012 = vpop.f32.mrb[0].mxu0
  %v1013 = vadd.f32 0.0, %v1012
  %v1014 = vpop.f32.mrb[0].mxu0
  %v1015 = vadd.f32 0.0, %v1014
  %1016 = vdwg.mxu0
  %v1017 = vand.u32 %v931, 4294901760
  %v1018 = vsub.f32 %v931, %v1017
  %v1019 = vand.u32 %v1018, 4294901760
  %v1020 = vsub.f32 %v1018, %v1019
  %v1021 = vand.u32 %v1020, 4294901760
  %1022 = vmatprep.subr.mxu0 %v1021
  %v1023 = vand.u32 %v930, 4294901760
  %v1024 = vsub.f32 %v930, %v1023
  %v1025 = vand.u32 %v1024, 4294901760
  %v1026 = vsub.f32 %v1024, %v1025
  %v1027 = vand.u32 %v1026, 4294901760
  %1028 = vmatpush1.msra.mxu0 %v1027
  %v1029 = vand.u32 %v933, 4294901760
  %v1030 = vsub.f32 %v933, %v1029
  %v1031 = vand.u32 %v1030, 4294901760
  %v1032 = vsub.f32 %v1030, %v1031
  %v1033 = vand.u32 %v1032, 4294901760
  %1034 = vmatprep.subr.mxu0 %v1033
  %v1035 = vand.u32 %v932, 4294901760
  %v1036 = vsub.f32 %v932, %v1035
  %v1037 = vand.u32 %v1036, 4294901760
  %v1038 = vsub.f32 %v1036, %v1037
  %v1039 = vand.u32 %v1038, 4294901760
  %1040 = vmatpush1.msra.mxu0 %v1039
  %1041 = vmatprep.subr.mxu0 0.0
  %1042 = vmatpush1.msra.mxu0 0.0
  %1043 = vmatprep.subr.mxu0 0.0
  %1044 = vmatpush1.msra.mxu0 0.0
  %1045 = vmatprep.subr.mxu0 0.0
  %1046 = vmatpush1.msra.mxu0 0.0
  %1047 = vmatprep.subr.mxu0 0.0
  %1048 = vmatpush1.msra.mxu0 0.0
  %1049 = vmatprep.subr.mxu0 0.0
  %1050 = vmatpush1.msra.mxu0 0.0
  %1051 = vmatprep.subr.mxu0 0.0
  %1052 = vmatpush1.msra.mxu0 0.0
  %1053 = vmatprep.subr.mxu0 0.0
  %1054 = vmatpush1.msra.mxu0 0.0
  %1055 = vmatprep.subr.mxu0 0.0
  %1056 = vmatpush1.msra.mxu0 0.0
  %1057 = vmatprep.subr.mxu0 0.0
  %1058 = vmatpush1.msra.mxu0 0.0
  %1059 = vmatprep.subr.mxu0 0.0
  %1060 = vmatpush1.msra.mxu0 0.0
  %1061 = vmatprep.subr.mxu0 0.0
  %1062 = vmatpush1.msra.mxu0 0.0
  %1063 = vmatprep.subr.mxu0 0.0
  %1064 = vmatpush1.msra.mxu0 0.0
  %1065 = vmatprep.subr.mxu0 0.0
  %1066 = vmatpush1.msra.mxu0 0.0
  %1067 = vmatprep.subr.mxu0 0.0
  %1068 = vmatpush1.msra.mxu0 0.0
  %1069 = vmatprep.subr.mxu0 0.0
  %1070 = vmatpush1.msra.mxu0 0.0
  %1071 = vmatprep.subr.mxu0 0.0
  %1072 = vmatpush1.msra.mxu0 0.0
  %1073 = vmatprep.subr.mxu0 0.0
  %1074 = vmatpush1.msra.mxu0 0.0
  %1075 = vmatprep.subr.mxu0 0.0
  %1076 = vmatpush1.msra.mxu0 0.0
  %1077 = vmatprep.subr.mxu0 0.0
  %1078 = vmatpush1.msra.mxu0 0.0
  %1079 = vmatprep.subr.mxu0 0.0
  %1080 = vmatpush1.msra.mxu0 0.0
  %1081 = vmatprep.subr.mxu0 0.0
  %1082 = vmatpush1.msra.mxu0 0.0
  %1083 = vmatprep.subr.mxu0 0.0
  %1084 = vmatpush1.msra.mxu0 0.0
  %1085 = vmatprep.subr.mxu0 0.0
  %1086 = vmatpush1.msra.mxu0 0.0
  %1087 = vmatprep.subr.mxu0 0.0
  %1088 = vmatpush1.msra.mxu0 0.0
  %1089 = vmatprep.subr.mxu0 0.0
  %1090 = vmatpush1.msra.mxu0 0.0
  %1091 = vmatprep.subr.mxu0 0.0
  %1092 = vmatpush1.msra.mxu0 0.0
  %1093 = vmatprep.subr.mxu0 0.0
  %1094 = vmatpush1.msra.mxu0 0.0
  %1095 = vmatprep.subr.mxu0 0.0
  %1096 = vmatpush1.msra.mxu0 0.0
  %1097 = vmatprep.subr.mxu0 0.0
  %1098 = vmatpush1.msra.mxu0 0.0
  %1099 = vmatprep.subr.mxu0 0.0
  %1100 = vmatpush1.msra.mxu0 0.0
  %1101 = vmatprep.mubr.f32.mxu0 0.0
  %v1102 = vand.u32 %v935, 4294901760
  %1103 = vmatmul.mubr.f32.gmra.mrb[0].mxu0 %v1102
  %v1104 = vpop.f32.mrb[0].mxu0
  %v1105 = vadd.f32 %v1013, %v1104
  %v1106 = vpop.f32.mrb[0].mxu0
  %v1107 = vadd.f32 %v1015, %v1106
  %1108 = vdwg.mxu0
  %v1109 = vand.u32 %v931, 4294901760
  %v1110 = vsub.f32 %v931, %v1109
  %1111 = vmatprep.subr.mxu0 %v1110
  %v1112 = vand.u32 %v930, 4294901760
  %v1113 = vsub.f32 %v930, %v1112
  %1114 = vmatpush1.msra.mxu0 %v1113
  %v1115 = vand.u32 %v933, 4294901760
  %v1116 = vsub.f32 %v933, %v1115
  %1117 = vmatprep.subr.mxu0 %v1116
  %v1118 = vand.u32 %v932, 4294901760
  %v1119 = vsub.f32 %v932, %v1118
  %1120 = vmatpush1.msra.mxu0 %v1119
  %1121 = vmatprep.subr.mxu0 0.0
  %1122 = vmatpush1.msra.mxu0 0.0
  %1123 = vmatprep.subr.mxu0 0.0
  %1124 = vmatpush1.msra.mxu0 0.0
  %1125 = vmatprep.subr.mxu0 0.0
  %1126 = vmatpush1.msra.mxu0 0.0
  %1127 = vmatprep.subr.mxu0 0.0
  %1128 = vmatpush1.msra.mxu0 0.0
  %1129 = vmatprep.subr.mxu0 0.0
  %1130 = vmatpush1.msra.mxu0 0.0
  %1131 = vmatprep.subr.mxu0 0.0
  %1132 = vmatpush1.msra.mxu0 0.0
  %1133 = vmatprep.subr.mxu0 0.0
  %1134 = vmatpush1.msra.mxu0 0.0
  %1135 = vmatprep.subr.mxu0 0.0
  %1136 = vmatpush1.msra.mxu0 0.0
  %1137 = vmatprep.subr.mxu0 0.0
  %1138 = vmatpush1.msra.mxu0 0.0
  %1139 = vmatprep.subr.mxu0 0.0
  %1140 = vmatpush1.msra.mxu0 0.0
  %1141 = vmatprep.subr.mxu0 0.0
  %1142 = vmatpush1.msra.mxu0 0.0
  %1143 = vmatprep.subr.mxu0 0.0
  %1144 = vmatpush1.msra.mxu0 0.0
  %1145 = vmatprep.subr.mxu0 0.0
  %1146 = vmatpush1.msra.mxu0 0.0
  %1147 = vmatprep.subr.mxu0 0.0
  %1148 = vmatpush1.msra.mxu0 0.0
  %1149 = vmatprep.subr.mxu0 0.0
  %1150 = vmatpush1.msra.mxu0 0.0
  %1151 = vmatprep.subr.mxu0 0.0
  %1152 = vmatpush1.msra.mxu0 0.0
  %1153 = vmatprep.subr.mxu0 0.0
  %1154 = vmatpush1.msra.mxu0 0.0
  %1155 = vmatprep.subr.mxu0 0.0
  %1156 = vmatpush1.msra.mxu0 0.0
  %1157 = vmatprep.subr.mxu0 0.0
  %1158 = vmatpush1.msra.mxu0 0.0
  %1159 = vmatprep.subr.mxu0 0.0
  %1160 = vmatpush1.msra.mxu0 0.0
  %1161 = vmatprep.subr.mxu0 0.0
  %1162 = vmatpush1.msra.mxu0 0.0
  %1163 = vmatprep.subr.mxu0 0.0
  %1164 = vmatpush1.msra.mxu0 0.0
  %1165 = vmatprep.subr.mxu0 0.0
  %1166 = vmatpush1.msra.mxu0 0.0
  %1167 = vmatprep.subr.mxu0 0.0
  %1168 = vmatpush1.msra.mxu0 0.0
  %1169 = vmatprep.subr.mxu0 0.0
  %1170 = vmatpush1.msra.mxu0 0.0
  %1171 = vmatprep.subr.mxu0 0.0
  %1172 = vmatpush1.msra.mxu0 0.0
  %1173 = vmatprep.subr.mxu0 0.0
  %1174 = vmatpush1.msra.mxu0 0.0
  %1175 = vmatprep.subr.mxu0 0.0
  %1176 = vmatpush1.msra.mxu0 0.0
  %1177 = vmatprep.subr.mxu0 0.0
  %1178 = vmatpush1.msra.mxu0 0.0
  %1179 = vmatprep.subr.mxu0 0.0
  %1180 = vmatpush1.msra.mxu0 0.0
  %1181 = vmatprep.mubr.f32.mxu0 0.0
  %v1182 = vand.u32 %v935, 4294901760
  %v1183 = vsub.f32 %v935, %v1182
  %1184 = vmatmul.mubr.f32.gmra.mrb[0].mxu0 %v1183
  %v1185 = vpop.f32.mrb[0].mxu0
  %v1186 = vadd.f32 %v1105, %v1185
  %v1187 = vpop.f32.mrb[0].mxu0
  %v1188 = vadd.f32 %v1107, %v1187
  %1189 = vdwg.mxu0
  %v1190 = vand.u32 %v931, 4294901760
  %1191 = vmatprep.subr.mxu0 %v1190
  %v1192 = vand.u32 %v930, 4294901760
  %1193 = vmatpush1.msra.mxu0 %v1192
  %v1194 = vand.u32 %v933, 4294901760
  %1195 = vmatprep.subr.mxu0 %v1194
  %v1196 = vand.u32 %v932, 4294901760
  %1197 = vmatpush1.msra.mxu0 %v1196
  %1198 = vmatprep.subr.mxu0 0.0
  %1199 = vmatpush1.msra.mxu0 0.0
  %1200 = vmatprep.subr.mxu0 0.0
  %1201 = vmatpush1.msra.mxu0 0.0
  %1202 = vmatprep.subr.mxu0 0.0
  %1203 = vmatpush1.msra.mxu0 0.0
  %1204 = vmatprep.subr.mxu0 0.0
  %1205 = vmatpush1.msra.mxu0 0.0
  %1206 = vmatprep.subr.mxu0 0.0
  %1207 = vmatpush1.msra.mxu0 0.0
  %1208 = vmatprep.subr.mxu0 0.0
  %1209 = vmatpush1.msra.mxu0 0.0
  %1210 = vmatprep.subr.mxu0 0.0
  %1211 = vmatpush1.msra.mxu0 0.0
  %1212 = vmatprep.subr.mxu0 0.0
  %1213 = vmatpush1.msra.mxu0 0.0
  %1214 = vmatprep.subr.mxu0 0.0
  %1215 = vmatpush1.msra.mxu0 0.0
  %1216 = vmatprep.subr.mxu0 0.0
  %1217 = vmatpush1.msra.mxu0 0.0
  %1218 = vmatprep.subr.mxu0 0.0
  %1219 = vmatpush1.msra.mxu0 0.0
  %1220 = vmatprep.subr.mxu0 0.0
  %1221 = vmatpush1.msra.mxu0 0.0
  %1222 = vmatprep.subr.mxu0 0.0
  %1223 = vmatpush1.msra.mxu0 0.0
  %1224 = vmatprep.subr.mxu0 0.0
  %1225 = vmatpush1.msra.mxu0 0.0
  %1226 = vmatprep.subr.mxu0 0.0
  %1227 = vmatpush1.msra.mxu0 0.0
  %1228 = vmatprep.subr.mxu0 0.0
  %1229 = vmatpush1.msra.mxu0 0.0
  %1230 = vmatprep.subr.mxu0 0.0
  %1231 = vmatpush1.msra.mxu0 0.0
  %1232 = vmatprep.subr.mxu0 0.0
  %1233 = vmatpush1.msra.mxu0 0.0
  %1234 = vmatprep.subr.mxu0 0.0
  %1235 = vmatpush1.msra.mxu0 0.0
  %1236 = vmatprep.subr.mxu0 0.0
  %1237 = vmatpush1.msra.mxu0 0.0
  %1238 = vmatprep.subr.mxu0 0.0
  %1239 = vmatpush1.msra.mxu0 0.0
  %1240 = vmatprep.subr.mxu0 0.0
  %1241 = vmatpush1.msra.mxu0 0.0
  %1242 = vmatprep.subr.mxu0 0.0
  %1243 = vmatpush1.msra.mxu0 0.0
  %1244 = vmatprep.subr.mxu0 0.0
  %1245 = vmatpush1.msra.mxu0 0.0
  %1246 = vmatprep.subr.mxu0 0.0
  %1247 = vmatpush1.msra.mxu0 0.0
  %1248 = vmatprep.subr.mxu0 0.0
  %1249 = vmatpush1.msra.mxu0 0.0
  %1250 = vmatprep.subr.mxu0 0.0
  %1251 = vmatpush1.msra.mxu0 0.0
  %1252 = vmatprep.subr.mxu0 0.0
  %1253 = vmatpush1.msra.mxu0 0.0
  %1254 = vmatprep.subr.mxu0 0.0
  %1255 = vmatpush1.msra.mxu0 0.0
  %1256 = vmatprep.subr.mxu0 0.0
  %1257 = vmatpush1.msra.mxu0 0.0
  %1258 = vmatprep.mubr.f32.mxu0 0.0
  %v1259 = vand.u32 %v935, 4294901760
  %v1260 = vsub.f32 %v935, %v1259
  %v1261 = vand.u32 %v1260, 4294901760
  %1262 = vmatmul.mubr.f32.gmra.mrb[0].mxu0 %v1261
  %v1263 = vpop.f32.mrb[0].mxu0
  %v1264 = vadd.f32 %v1186, %v1263
  %v1265 = vpop.f32.mrb[0].mxu0
  %v1266 = vadd.f32 %v1188, %v1265
  %1267 = vdwg.mxu0
  %v1268 = vand.u32 %v931, 4294901760
  %v1269 = vsub.f32 %v931, %v1268
  %v1270 = vand.u32 %v1269, 4294901760
  %1271 = vmatprep.subr.mxu0 %v1270
  %v1272 = vand.u32 %v930, 4294901760
  %v1273 = vsub.f32 %v930, %v1272
  %v1274 = vand.u32 %v1273, 4294901760
  %1275 = vmatpush1.msra.mxu0 %v1274
  %v1276 = vand.u32 %v933, 4294901760
  %v1277 = vsub.f32 %v933, %v1276
  %v1278 = vand.u32 %v1277, 4294901760
  %1279 = vmatprep.subr.mxu0 %v1278
  %v1280 = vand.u32 %v932, 4294901760
  %v1281 = vsub.f32 %v932, %v1280
  %v1282 = vand.u32 %v1281, 4294901760
  %1283 = vmatpush1.msra.mxu0 %v1282
  %1284 = vmatprep.subr.mxu0 0.0
  %1285 = vmatpush1.msra.mxu0 0.0
  %1286 = vmatprep.subr.mxu0 0.0
  %1287 = vmatpush1.msra.mxu0 0.0
  %1288 = vmatprep.subr.mxu0 0.0
  %1289 = vmatpush1.msra.mxu0 0.0
  %1290 = vmatprep.subr.mxu0 0.0
  %1291 = vmatpush1.msra.mxu0 0.0
  %1292 = vmatprep.subr.mxu0 0.0
  %1293 = vmatpush1.msra.mxu0 0.0
  %1294 = vmatprep.subr.mxu0 0.0
  %1295 = vmatpush1.msra.mxu0 0.0
  %1296 = vmatprep.subr.mxu0 0.0
  %1297 = vmatpush1.msra.mxu0 0.0
  %1298 = vmatprep.subr.mxu0 0.0
  %1299 = vmatpush1.msra.mxu0 0.0
  %1300 = vmatprep.subr.mxu0 0.0
  %1301 = vmatpush1.msra.mxu0 0.0
  %1302 = vmatprep.subr.mxu0 0.0
  %1303 = vmatpush1.msra.mxu0 0.0
  %1304 = vmatprep.subr.mxu0 0.0
  %1305 = vmatpush1.msra.mxu0 0.0
  %1306 = vmatprep.subr.mxu0 0.0
  %1307 = vmatpush1.msra.mxu0 0.0
  %1308 = vmatprep.subr.mxu0 0.0
  %1309 = vmatpush1.msra.mxu0 0.0
  %1310 = vmatprep.subr.mxu0 0.0
  %1311 = vmatpush1.msra.mxu0 0.0
  %1312 = vmatprep.subr.mxu0 0.0
  %1313 = vmatpush1.msra.mxu0 0.0
  %1314 = vmatprep.subr.mxu0 0.0
  %1315 = vmatpush1.msra.mxu0 0.0
  %1316 = vmatprep.subr.mxu0 0.0
  %1317 = vmatpush1.msra.mxu0 0.0
  %1318 = vmatprep.subr.mxu0 0.0
  %1319 = vmatpush1.msra.mxu0 0.0
  %1320 = vmatprep.subr.mxu0 0.0
  %1321 = vmatpush1.msra.mxu0 0.0
  %1322 = vmatprep.subr.mxu0 0.0
  %1323 = vmatpush1.msra.mxu0 0.0
  %1324 = vmatprep.subr.mxu0 0.0
  %1325 = vmatpush1.msra.mxu0 0.0
  %1326 = vmatprep.subr.mxu0 0.0
  %1327 = vmatpush1.msra.mxu0 0.0
  %1328 = vmatprep.subr.mxu0 0.0
  %1329 = vmatpush1.msra.mxu0 0.0
  %1330 = vmatprep.subr.mxu0 0.0
  %1331 = vmatpush1.msra.mxu0 0.0
  %1332 = vmatprep.subr.mxu0 0.0
  %1333 = vmatpush1.msra.mxu0 0.0
  %1334 = vmatprep.subr.mxu0 0.0
  %1335 = vmatpush1.msra.mxu0 0.0
  %1336 = vmatprep.subr.mxu0 0.0
  %1337 = vmatpush1.msra.mxu0 0.0
  %1338 = vmatprep.subr.mxu0 0.0
  %1339 = vmatpush1.msra.mxu0 0.0
  %1340 = vmatprep.subr.mxu0 0.0
  %1341 = vmatpush1.msra.mxu0 0.0
  %1342 = vmatprep.subr.mxu0 0.0
  %1343 = vmatpush1.msra.mxu0 0.0
  %1344 = vmatprep.mubr.f32.mxu0 0.0
  %v1345 = vand.u32 %v935, 4294901760
  %1346 = vmatmul.mubr.f32.gmra.mrb[0].mxu0 %v1345
  %v1347 = vpop.f32.mrb[0].mxu0
  %v1348 = vadd.f32 %v1264, %v1347
  %v1349 = vpop.f32.mrb[0].mxu0
  %v1350 = vadd.f32 %v1266, %v1349
  %1351 = vdwg.mxu0
  %v1352 = vand.u32 %v931, 4294901760
  %1353 = vmatprep.subr.mxu0 %v1352
  %v1354 = vand.u32 %v930, 4294901760
  %1355 = vmatpush1.msra.mxu0 %v1354
  %v1356 = vand.u32 %v933, 4294901760
  %1357 = vmatprep.subr.mxu0 %v1356
  %v1358 = vand.u32 %v932, 4294901760
  %1359 = vmatpush1.msra.mxu0 %v1358
  %1360 = vmatprep.subr.mxu0 0.0
  %1361 = vmatpush1.msra.mxu0 0.0
  %1362 = vmatprep.subr.mxu0 0.0
  %1363 = vmatpush1.msra.mxu0 0.0
  %1364 = vmatprep.subr.mxu0 0.0
  %1365 = vmatpush1.msra.mxu0 0.0
  %1366 = vmatprep.subr.mxu0 0.0
  %1367 = vmatpush1.msra.mxu0 0.0
  %1368 = vmatprep.subr.mxu0 0.0
  %1369 = vmatpush1.msra.mxu0 0.0
  %1370 = vmatprep.subr.mxu0 0.0
  %1371 = vmatpush1.msra.mxu0 0.0
  %1372 = vmatprep.subr.mxu0 0.0
  %1373 = vmatpush1.msra.mxu0 0.0
  %1374 = vmatprep.subr.mxu0 0.0
  %1375 = vmatpush1.msra.mxu0 0.0
  %1376 = vmatprep.subr.mxu0 0.0
  %1377 = vmatpush1.msra.mxu0 0.0
  %1378 = vmatprep.subr.mxu0 0.0
  %1379 = vmatpush1.msra.mxu0 0.0
  %1380 = vmatprep.subr.mxu0 0.0
  %1381 = vmatpush1.msra.mxu0 0.0
  %1382 = vmatprep.subr.mxu0 0.0
  %1383 = vmatpush1.msra.mxu0 0.0
  %1384 = vmatprep.subr.mxu0 0.0
  %1385 = vmatpush1.msra.mxu0 0.0
  %1386 = vmatprep.subr.mxu0 0.0
  %1387 = vmatpush1.msra.mxu0 0.0
  %1388 = vmatprep.subr.mxu0 0.0
  %1389 = vmatpush1.msra.mxu0 0.0
  %1390 = vmatprep.subr.mxu0 0.0
  %1391 = vmatpush1.msra.mxu0 0.0
  %1392 = vmatprep.subr.mxu0 0.0
  %1393 = vmatpush1.msra.mxu0 0.0
  %1394 = vmatprep.subr.mxu0 0.0
  %1395 = vmatpush1.msra.mxu0 0.0
  %1396 = vmatprep.subr.mxu0 0.0
  %1397 = vmatpush1.msra.mxu0 0.0
  %1398 = vmatprep.subr.mxu0 0.0
  %1399 = vmatpush1.msra.mxu0 0.0
  %1400 = vmatprep.subr.mxu0 0.0
  %1401 = vmatpush1.msra.mxu0 0.0
  %1402 = vmatprep.subr.mxu0 0.0
  %1403 = vmatpush1.msra.mxu0 0.0
  %1404 = vmatprep.subr.mxu0 0.0
  %1405 = vmatpush1.msra.mxu0 0.0
  %1406 = vmatprep.subr.mxu0 0.0
  %1407 = vmatpush1.msra.mxu0 0.0
  %1408 = vmatprep.subr.mxu0 0.0
  %1409 = vmatpush1.msra.mxu0 0.0
  %1410 = vmatprep.subr.mxu0 0.0
  %1411 = vmatpush1.msra.mxu0 0.0
  %1412 = vmatprep.subr.mxu0 0.0
  %1413 = vmatpush1.msra.mxu0 0.0
  %1414 = vmatprep.subr.mxu0 0.0
  %1415 = vmatpush1.msra.mxu0 0.0
  %1416 = vmatprep.subr.mxu0 0.0
  %1417 = vmatpush1.msra.mxu0 0.0
  %1418 = vmatprep.subr.mxu0 0.0
  %1419 = vmatpush1.msra.mxu0 0.0
  %1420 = vmatprep.mubr.f32.mxu0 0.0
  %v1421 = vand.u32 %v935, 4294901760
  %1422 = vmatmul.mubr.f32.gmra.mrb[0].mxu0 %v1421
  %v1423 = vpop.f32.mrb[0].mxu0
  %v1424 = vadd.f32 %v1348, %v1423
  %v1425 = vpop.f32.mrb[0].mxu0
  %v1426 = vadd.f32 %v1350, %v1425
  %1427 = vdwg.mxu0
  %v1428 = vmul.f32 %v21, %v1424
  %v1429 = vmul.f32 %v22, %v1426
  %v1430 = vld [vmem:[%s3] sm:$0xff]
  %v1431 = vld [vmem:[%s3 + $0x8] sm:$0xff]
  %v1432 = vld [vmem:[%s3 + $0x10] sm:$0xff]
  %v1433 = vld [vmem:[%s3 + $0x18] sm:$0xff]
  %v1434 = vld [vmem:[%s3 + $0x20] sm:$0xff]
  %v1435 = vld [vmem:[%s3 + $0x28] sm:$0xff]
  %v1436 = vld [vmem:[%s3 + $0x30] sm:$0xff]
  %v1437 = vld [vmem:[%s3 + $0x38] sm:$0xff]
  %v1438 = vld [vmem:[%s3 + $0x40] sm:$0xff]
  %v1439 = vld [vmem:[%s3 + $0x48] sm:$0xff]
  %v1440 = vld [vmem:[%s3 + $0x50] sm:$0xff]
  %v1441 = vld [vmem:[%s3 + $0x58] sm:$0xff]
  %v1442 = vld [vmem:[%s3 + $0x60] sm:$0xff]
  %v1443 = vld [vmem:[%s3 + $0x68] sm:$0xff]
  %v1444 = vld [vmem:[%s3 + $0x70] sm:$0xff]
  %v1445 = vld [vmem:[%s3 + $0x78] sm:$0xff]
  %v1446 = vld [vmem:[%s3 + $0x80] sm:$0xff]
  %v1447 = vld [vmem:[%s3 + $0x88] sm:$0xff]
  %v1448 = vld [vmem:[%s3 + $0x90] sm:$0xff]
  %v1449 = vld [vmem:[%s3 + $0x98] sm:$0xff]
  %v1450 = vld [vmem:[%s3 + $0xa0] sm:$0xff]
  %v1451 = vld [vmem:[%s3 + $0xa8] sm:$0xff]
  %v1452 = vld [vmem:[%s3 + $0xb0] sm:$0xff]
  %v1453 = vld [vmem:[%s3 + $0xb8] sm:$0xff]
  %v1454 = vld [vmem:[%s3 + $0xc0] sm:$0xff]
  %v1455 = vld [vmem:[%s3 + $0xc8] sm:$0xff]
  %v1456 = vld [vmem:[%s3 + $0xd0] sm:$0xff]
  %v1457 = vld [vmem:[%s3 + $0xd8] sm:$0xff]
  %v1458 = vld [vmem:[%s3 + $0xe0] sm:$0xff]
  %v1459 = vld [vmem:[%s3 + $0xe8] sm:$0xff]
  %v1460 = vld [vmem:[%s3 + $0xf0] sm:$0xff]
  %v1461 = vld [vmem:[%s3 + $0xf8] sm:$0xff]
  %1462 = vmatprep.subr.mxu0 0.0
  %v1463 = vand.u32 %v1430, 4294901760
  %1464 = vmatpush1.msra.mxu0 %v1463
  %1465 = vmatprep.subr.mxu0 0.0
  %v1466 = vand.u32 %v1431, 4294901760
  %1467 = vmatpush1.msra.mxu0 %v1466
  %1468 = vmatprep.subr.mxu0 0.0
  %v1469 = vand.u32 %v1432, 4294901760
  %1470 = vmatpush1.msra.mxu0 %v1469
  %1471 = vmatprep.subr.mxu0 0.0
  %v1472 = vand.u32 %v1433, 4294901760
  %1473 = vmatpush1.msra.mxu0 %v1472
  %1474 = vmatprep.subr.mxu0 0.0
  %v1475 = vand.u32 %v1434, 4294901760
  %1476 = vmatpush1.msra.mxu0 %v1475
  %1477 = vmatprep.subr.mxu0 0.0
  %v1478 = vand.u32 %v1435, 4294901760
  %1479 = vmatpush1.msra.mxu0 %v1478
  %1480 = vmatprep.subr.mxu0 0.0
  %v1481 = vand.u32 %v1436, 4294901760
  %1482 = vmatpush1.msra.mxu0 %v1481
  %1483 = vmatprep.subr.mxu0 0.0
  %v1484 = vand.u32 %v1437, 4294901760
  %1485 = vmatpush1.msra.mxu0 %v1484
  %1486 = vmatprep.subr.mxu0 0.0
  %v1487 = vand.u32 %v1438, 4294901760
  %1488 = vmatpush1.msra.mxu0 %v1487
  %1489 = vmatprep.subr.mxu0 0.0
  %v1490 = vand.u32 %v1439, 4294901760
  %1491 = vmatpush1.msra.mxu0 %v1490
  %1492 = vmatprep.subr.mxu0 0.0
  %v1493 = vand.u32 %v1440, 4294901760
  %1494 = vmatpush1.msra.mxu0 %v1493
  %1495 = vmatprep.subr.mxu0 0.0
  %v1496 = vand.u32 %v1441, 4294901760
  %1497 = vmatpush1.msra.mxu0 %v1496
  %1498 = vmatprep.subr.mxu0 0.0
  %v1499 = vand.u32 %v1442, 4294901760
  %1500 = vmatpush1.msra.mxu0 %v1499
  %1501 = vmatprep.subr.mxu0 0.0
  %v1502 = vand.u32 %v1443, 4294901760
  %1503 = vmatpush1.msra.mxu0 %v1502
  %1504 = vmatprep.subr.mxu0 0.0
  %v1505 = vand.u32 %v1444, 4294901760
  %1506 = vmatpush1.msra.mxu0 %v1505
  %1507 = vmatprep.subr.mxu0 0.0
  %v1508 = vand.u32 %v1445, 4294901760
  %1509 = vmatpush1.msra.mxu0 %v1508
  %1510 = vmatprep.subr.mxu0 0.0
  %v1511 = vand.u32 %v1446, 4294901760
  %1512 = vmatpush1.msra.mxu0 %v1511
  %1513 = vmatprep.subr.mxu0 0.0
  %v1514 = vand.u32 %v1447, 4294901760
  %1515 = vmatpush1.msra.mxu0 %v1514
  %1516 = vmatprep.subr.mxu0 0.0
  %v1517 = vand.u32 %v1448, 4294901760
  %1518 = vmatpush1.msra.mxu0 %v1517
  %1519 = vmatprep.subr.mxu0 0.0
  %v1520 = vand.u32 %v1449, 4294901760
  %1521 = vmatpush1.msra.mxu0 %v1520
  %1522 = vmatprep.subr.mxu0 0.0
  %v1523 = vand.u32 %v1450, 4294901760
  %1524 = vmatpush1.msra.mxu0 %v1523
  %1525 = vmatprep.subr.mxu0 0.0
  %v1526 = vand.u32 %v1451, 4294901760
  %1527 = vmatpush1.msra.mxu0 %v1526
  %1528 = vmatprep.subr.mxu0 0.0
  %v1529 = vand.u32 %v1452, 4294901760
  %1530 = vmatpush1.msra.mxu0 %v1529
  %1531 = vmatprep.subr.mxu0 0.0
  %v1532 = vand.u32 %v1453, 4294901760
  %1533 = vmatpush1.msra.mxu0 %v1532
  %1534 = vmatprep.subr.mxu0 0.0
  %v1535 = vand.u32 %v1454, 4294901760
  %1536 = vmatpush1.msra.mxu0 %v1535
  %1537 = vmatprep.subr.mxu0 0.0
  %v1538 = vand.u32 %v1455, 4294901760
  %1539 = vmatpush1.msra.mxu0 %v1538
  %1540 = vmatprep.subr.mxu0 0.0
  %v1541 = vand.u32 %v1456, 4294901760
  %1542 = vmatpush1.msra.mxu0 %v1541
  %1543 = vmatprep.subr.mxu0 0.0
  %v1544 = vand.u32 %v1457, 4294901760
  %1545 = vmatpush1.msra.mxu0 %v1544
  %1546 = vmatprep.subr.mxu0 0.0
  %v1547 = vand.u32 %v1458, 4294901760
  %1548 = vmatpush1.msra.mxu0 %v1547
  %1549 = vmatprep.subr.mxu0 0.0
  %v1550 = vand.u32 %v1459, 4294901760
  %1551 = vmatpush1.msra.mxu0 %v1550
  %1552 = vmatprep.subr.mxu0 0.0
  %v1553 = vand.u32 %v1460, 4294901760
  %1554 = vmatpush1.msra.mxu0 %v1553
  %1555 = vmatprep.subr.mxu0 0.0
  %v1556 = vand.u32 %v1461, 4294901760
  %1557 = vmatpush1.msra.mxu0 %v1556
  %v1558 = vand.u32 %v1429, 4294901760
  %v1559 = vsub.f32 %v1429, %v1558
  %v1560 = vand.u32 %v1559, 4294901760
  %v1561 = vsub.f32 %v1559, %v1560
  %v1562 = vand.u32 %v1561, 4294901760
  %1563 = vmatprep.mubr.f32.mxu0 %v1562
  %v1564 = vand.u32 %v1428, 4294901760
  %v1565 = vsub.f32 %v1428, %v1564
  %v1566 = vand.u32 %v1565, 4294901760
  %v1567 = vsub.f32 %v1565, %v1566
  %v1568 = vand.u32 %v1567, 4294901760
  %1569 = vmatmul.mubr.f32.gmra.mrb[0].mxu0 %v1568
  %v1570 = vpop.f32.mrb[0].mxu0
  %v1571 = vadd.f32 0.0, %v1570
  %v1572 = vpop.f32.mrb[0].mxu0
  %1573 = vdwg.mxu0
  %1574 = vmatprep.subr.mxu0 0.0
  %v1575 = vand.u32 %v1430, 4294901760
  %v1576 = vsub.f32 %v1430, %v1575
  %v1577 = vand.u32 %v1576, 4294901760
  %v1578 = vsub.f32 %v1576, %v1577
  %v1579 = vand.u32 %v1578, 4294901760
  %1580 = vmatpush1.msra.mxu0 %v1579
  %1581 = vmatprep.subr.mxu0 0.0
  %v1582 = vand.u32 %v1431, 4294901760
  %v1583 = vsub.f32 %v1431, %v1582
  %v1584 = vand.u32 %v1583, 4294901760
  %v1585 = vsub.f32 %v1583, %v1584
  %v1586 = vand.u32 %v1585, 4294901760
  %1587 = vmatpush1.msra.mxu0 %v1586
  %1588 = vmatprep.subr.mxu0 0.0
  %v1589 = vand.u32 %v1432, 4294901760
  %v1590 = vsub.f32 %v1432, %v1589
  %v1591 = vand.u32 %v1590, 4294901760
  %v1592 = vsub.f32 %v1590, %v1591
  %v1593 = vand.u32 %v1592, 4294901760
  %1594 = vmatpush1.msra.mxu0 %v1593
  %1595 = vmatprep.subr.mxu0 0.0
  %v1596 = vand.u32 %v1433, 4294901760
  %v1597 = vsub.f32 %v1433, %v1596
  %v1598 = vand.u32 %v1597, 4294901760
  %v1599 = vsub.f32 %v1597, %v1598
  %v1600 = vand.u32 %v1599, 4294901760
  %1601 = vmatpush1.msra.mxu0 %v1600
  %1602 = vmatprep.subr.mxu0 0.0
  %v1603 = vand.u32 %v1434, 4294901760
  %v1604 = vsub.f32 %v1434, %v1603
  %v1605 = vand.u32 %v1604, 4294901760
  %v1606 = vsub.f32 %v1604, %v1605
  %v1607 = vand.u32 %v1606, 4294901760
  %1608 = vmatpush1.msra.mxu0 %v1607
  %1609 = vmatprep.subr.mxu0 0.0
  %v1610 = vand.u32 %v1435, 4294901760
  %v1611 = vsub.f32 %v1435, %v1610
  %v1612 = vand.u32 %v1611, 4294901760
  %v1613 = vsub.f32 %v1611, %v1612
  %v1614 = vand.u32 %v1613, 4294901760
  %1615 = vmatpush1.msra.mxu0 %v1614
  %1616 = vmatprep.subr.mxu0 0.0
  %v1617 = vand.u32 %v1436, 4294901760
  %v1618 = vsub.f32 %v1436, %v1617
  %v1619 = vand.u32 %v1618, 4294901760
  %v1620 = vsub.f32 %v1618, %v1619
  %v1621 = vand.u32 %v1620, 4294901760
  %1622 = vmatpush1.msra.mxu0 %v1621
  %1623 = vmatprep.subr.mxu0 0.0
  %v1624 = vand.u32 %v1437, 4294901760
  %v1625 = vsub.f32 %v1437, %v1624
  %v1626 = vand.u32 %v1625, 4294901760
  %v1627 = vsub.f32 %v1625, %v1626
  %v1628 = vand.u32 %v1627, 4294901760
  %1629 = vmatpush1.msra.mxu0 %v1628
  %1630 = vmatprep.subr.mxu0 0.0
  %v1631 = vand.u32 %v1438, 4294901760
  %v1632 = vsub.f32 %v1438, %v1631
  %v1633 = vand.u32 %v1632, 4294901760
  %v1634 = vsub.f32 %v1632, %v1633
  %v1635 = vand.u32 %v1634, 4294901760
  %1636 = vmatpush1.msra.mxu0 %v1635
  %1637 = vmatprep.subr.mxu0 0.0
  %v1638 = vand.u32 %v1439, 4294901760
  %v1639 = vsub.f32 %v1439, %v1638
  %v1640 = vand.u32 %v1639, 4294901760
  %v1641 = vsub.f32 %v1639, %v1640
  %v1642 = vand.u32 %v1641, 4294901760
  %1643 = vmatpush1.msra.mxu0 %v1642
  %1644 = vmatprep.subr.mxu0 0.0
  %v1645 = vand.u32 %v1440, 4294901760
  %v1646 = vsub.f32 %v1440, %v1645
  %v1647 = vand.u32 %v1646, 4294901760
  %v1648 = vsub.f32 %v1646, %v1647
  %v1649 = vand.u32 %v1648, 4294901760
  %1650 = vmatpush1.msra.mxu0 %v1649
  %1651 = vmatprep.subr.mxu0 0.0
  %v1652 = vand.u32 %v1441, 4294901760
  %v1653 = vsub.f32 %v1441, %v1652
  %v1654 = vand.u32 %v1653, 4294901760
  %v1655 = vsub.f32 %v1653, %v1654
  %v1656 = vand.u32 %v1655, 4294901760
  %1657 = vmatpush1.msra.mxu0 %v1656
  %1658 = vmatprep.subr.mxu0 0.0
  %v1659 = vand.u32 %v1442, 4294901760
  %v1660 = vsub.f32 %v1442, %v1659
  %v1661 = vand.u32 %v1660, 4294901760
  %v1662 = vsub.f32 %v1660, %v1661
  %v1663 = vand.u32 %v1662, 4294901760
  %1664 = vmatpush1.msra.mxu0 %v1663
  %1665 = vmatprep.subr.mxu0 0.0
  %v1666 = vand.u32 %v1443, 4294901760
  %v1667 = vsub.f32 %v1443, %v1666
  %v1668 = vand.u32 %v1667, 4294901760
  %v1669 = vsub.f32 %v1667, %v1668
  %v1670 = vand.u32 %v1669, 4294901760
  %1671 = vmatpush1.msra.mxu0 %v1670
  %1672 = vmatprep.subr.mxu0 0.0
  %v1673 = vand.u32 %v1444, 4294901760
  %v1674 = vsub.f32 %v1444, %v1673
  %v1675 = vand.u32 %v1674, 4294901760
  %v1676 = vsub.f32 %v1674, %v1675
  %v1677 = vand.u32 %v1676, 4294901760
  %1678 = vmatpush1.msra.mxu0 %v1677
  %1679 = vmatprep.subr.mxu0 0.0
  %v1680 = vand.u32 %v1445, 4294901760
  %v1681 = vsub.f32 %v1445, %v1680
  %v1682 = vand.u32 %v1681, 4294901760
  %v1683 = vsub.f32 %v1681, %v1682
  %v1684 = vand.u32 %v1683, 4294901760
  %1685 = vmatpush1.msra.mxu0 %v1684
  %1686 = vmatprep.subr.mxu0 0.0
  %v1687 = vand.u32 %v1446, 4294901760
  %v1688 = vsub.f32 %v1446, %v1687
  %v1689 = vand.u32 %v1688, 4294901760
  %v1690 = vsub.f32 %v1688, %v1689
  %v1691 = vand.u32 %v1690, 4294901760
  %1692 = vmatpush1.msra.mxu0 %v1691
  %1693 = vmatprep.subr.mxu0 0.0
  %v1694 = vand.u32 %v1447, 4294901760
  %v1695 = vsub.f32 %v1447, %v1694
  %v1696 = vand.u32 %v1695, 4294901760
  %v1697 = vsub.f32 %v1695, %v1696
  %v1698 = vand.u32 %v1697, 4294901760
  %1699 = vmatpush1.msra.mxu0 %v1698
  %1700 = vmatprep.subr.mxu0 0.0
  %v1701 = vand.u32 %v1448, 4294901760
  %v1702 = vsub.f32 %v1448, %v1701
  %v1703 = vand.u32 %v1702, 4294901760
  %v1704 = vsub.f32 %v1702, %v1703
  %v1705 = vand.u32 %v1704, 4294901760
  %1706 = vmatpush1.msra.mxu0 %v1705
  %1707 = vmatprep.subr.mxu0 0.0
  %v1708 = vand.u32 %v1449, 4294901760
  %v1709 = vsub.f32 %v1449, %v1708
  %v1710 = vand.u32 %v1709, 4294901760
  %v1711 = vsub.f32 %v1709, %v1710
  %v1712 = vand.u32 %v1711, 4294901760
  %1713 = vmatpush1.msra.mxu0 %v1712
  %1714 = vmatprep.subr.mxu0 0.0
  %v1715 = vand.u32 %v1450, 4294901760
  %v1716 = vsub.f32 %v1450, %v1715
  %v1717 = vand.u32 %v1716, 4294901760
  %v1718 = vsub.f32 %v1716, %v1717
  %v1719 = vand.u32 %v1718, 4294901760
  %1720 = vmatpush1.msra.mxu0 %v1719
  %1721 = vmatprep.subr.mxu0 0.0
  %v1722 = vand.u32 %v1451, 4294901760
  %v1723 = vsub.f32 %v1451, %v1722
  %v1724 = vand.u32 %v1723, 4294901760
  %v1725 = vsub.f32 %v1723, %v1724
  %v1726 = vand.u32 %v1725, 4294901760
  %1727 = vmatpush1.msra.mxu0 %v1726
  %1728 = vmatprep.subr.mxu0 0.0
  %v1729 = vand.u32 %v1452, 4294901760
  %v1730 = vsub.f32 %v1452, %v1729
  %v1731 = vand.u32 %v1730, 4294901760
  %v1732 = vsub.f32 %v1730, %v1731
  %v1733 = vand.u32 %v1732, 4294901760
  %1734 = vmatpush1.msra.mxu0 %v1733
  %1735 = vmatprep.subr.mxu0 0.0
  %v1736 = vand.u32 %v1453, 4294901760
  %v1737 = vsub.f32 %v1453, %v1736
  %v1738 = vand.u32 %v1737, 4294901760
  %v1739 = vsub.f32 %v1737, %v1738
  %v1740 = vand.u32 %v1739, 4294901760
  %1741 = vmatpush1.msra.mxu0 %v1740
  %1742 = vmatprep.subr.mxu0 0.0
  %v1743 = vand.u32 %v1454, 4294901760
  %v1744 = vsub.f32 %v1454, %v1743
  %v1745 = vand.u32 %v1744, 4294901760
  %v1746 = vsub.f32 %v1744, %v1745
  %v1747 = vand.u32 %v1746, 4294901760
  %1748 = vmatpush1.msra.mxu0 %v1747
  %1749 = vmatprep.subr.mxu0 0.0
  %v1750 = vand.u32 %v1455, 4294901760
  %v1751 = vsub.f32 %v1455, %v1750
  %v1752 = vand.u32 %v1751, 4294901760
  %v1753 = vsub.f32 %v1751, %v1752
  %v1754 = vand.u32 %v1753, 4294901760
  %1755 = vmatpush1.msra.mxu0 %v1754
  %1756 = vmatprep.subr.mxu0 0.0
  %v1757 = vand.u32 %v1456, 4294901760
  %v1758 = vsub.f32 %v1456, %v1757
  %v1759 = vand.u32 %v1758, 4294901760
  %v1760 = vsub.f32 %v1758, %v1759
  %v1761 = vand.u32 %v1760, 4294901760
  %1762 = vmatpush1.msra.mxu0 %v1761
  %1763 = vmatprep.subr.mxu0 0.0
  %v1764 = vand.u32 %v1457, 4294901760
  %v1765 = vsub.f32 %v1457, %v1764
  %v1766 = vand.u32 %v1765, 4294901760
  %v1767 = vsub.f32 %v1765, %v1766
  %v1768 = vand.u32 %v1767, 4294901760
  %1769 = vmatpush1.msra.mxu0 %v1768
  %1770 = vmatprep.subr.mxu0 0.0
  %v1771 = vand.u32 %v1458, 4294901760
  %v1772 = vsub.f32 %v1458, %v1771
  %v1773 = vand.u32 %v1772, 4294901760
  %v1774 = vsub.f32 %v1772, %v1773
  %v1775 = vand.u32 %v1774, 4294901760
  %1776 = vmatpush1.msra.mxu0 %v1775
  %1777 = vmatprep.subr.mxu0 0.0
  %v1778 = vand.u32 %v1459, 4294901760
  %v1779 = vsub.f32 %v1459, %v1778
  %v1780 = vand.u32 %v1779, 4294901760
  %v1781 = vsub.f32 %v1779, %v1780
  %v1782 = vand.u32 %v1781, 4294901760
  %1783 = vmatpush1.msra.mxu0 %v1782
  %1784 = vmatprep.subr.mxu0 0.0
  %v1785 = vand.u32 %v1460, 4294901760
  %v1786 = vsub.f32 %v1460, %v1785
  %v1787 = vand.u32 %v1786, 4294901760
  %v1788 = vsub.f32 %v1786, %v1787
  %v1789 = vand.u32 %v1788, 4294901760
  %1790 = vmatpush1.msra.mxu0 %v1789
  %1791 = vmatprep.subr.mxu0 0.0
  %v1792 = vand.u32 %v1461, 4294901760
  %v1793 = vsub.f32 %v1461, %v1792
  %v1794 = vand.u32 %v1793, 4294901760
  %v1795 = vsub.f32 %v1793, %v1794
  %v1796 = vand.u32 %v1795, 4294901760
  %1797 = vmatpush1.msra.mxu0 %v1796
  %v1798 = vand.u32 %v1429, 4294901760
  %1799 = vmatprep.mubr.f32.mxu0 %v1798
  %v1800 = vand.u32 %v1428, 4294901760
  %1801 = vmatmul.mubr.f32.gmra.mrb[0].mxu0 %v1800
  %v1802 = vpop.f32.mrb[0].mxu0
  %v1803 = vadd.f32 %v1571, %v1802
  %v1804 = vpop.f32.mrb[0].mxu0
  %1805 = vdwg.mxu0
  %1806 = vmatprep.subr.mxu0 0.0
  %v1807 = vand.u32 %v1430, 4294901760
  %v1808 = vsub.f32 %v1430, %v1807
  %1809 = vmatpush1.msra.mxu0 %v1808
  %1810 = vmatprep.subr.mxu0 0.0
  %v1811 = vand.u32 %v1431, 4294901760
  %v1812 = vsub.f32 %v1431, %v1811
  %1813 = vmatpush1.msra.mxu0 %v1812
  %1814 = vmatprep.subr.mxu0 0.0
  %v1815 = vand.u32 %v1432, 4294901760
  %v1816 = vsub.f32 %v1432, %v1815
  %1817 = vmatpush1.msra.mxu0 %v1816
  %1818 = vmatprep.subr.mxu0 0.0
  %v1819 = vand.u32 %v1433, 4294901760
  %v1820 = vsub.f32 %v1433, %v1819
  %1821 = vmatpush1.msra.mxu0 %v1820
  %1822 = vmatprep.subr.mxu0 0.0
  %v1823 = vand.u32 %v1434, 4294901760
  %v1824 = vsub.f32 %v1434, %v1823
  %1825 = vmatpush1.msra.mxu0 %v1824
  %1826 = vmatprep.subr.mxu0 0.0
  %v1827 = vand.u32 %v1435, 4294901760
  %v1828 = vsub.f32 %v1435, %v1827
  %1829 = vmatpush1.msra.mxu0 %v1828
  %1830 = vmatprep.subr.mxu0 0.0
  %v1831 = vand.u32 %v1436, 4294901760
  %v1832 = vsub.f32 %v1436, %v1831
  %1833 = vmatpush1.msra.mxu0 %v1832
  %1834 = vmatprep.subr.mxu0 0.0
  %v1835 = vand.u32 %v1437, 4294901760
  %v1836 = vsub.f32 %v1437, %v1835
  %1837 = vmatpush1.msra.mxu0 %v1836
  %1838 = vmatprep.subr.mxu0 0.0
  %v1839 = vand.u32 %v1438, 4294901760
  %v1840 = vsub.f32 %v1438, %v1839
  %1841 = vmatpush1.msra.mxu0 %v1840
  %1842 = vmatprep.subr.mxu0 0.0
  %v1843 = vand.u32 %v1439, 4294901760
  %v1844 = vsub.f32 %v1439, %v1843
  %1845 = vmatpush1.msra.mxu0 %v1844
  %1846 = vmatprep.subr.mxu0 0.0
  %v1847 = vand.u32 %v1440, 4294901760
  %v1848 = vsub.f32 %v1440, %v1847
  %1849 = vmatpush1.msra.mxu0 %v1848
  %1850 = vmatprep.subr.mxu0 0.0
  %v1851 = vand.u32 %v1441, 4294901760
  %v1852 = vsub.f32 %v1441, %v1851
  %1853 = vmatpush1.msra.mxu0 %v1852
  %1854 = vmatprep.subr.mxu0 0.0
  %v1855 = vand.u32 %v1442, 4294901760
  %v1856 = vsub.f32 %v1442, %v1855
  %1857 = vmatpush1.msra.mxu0 %v1856
  %1858 = vmatprep.subr.mxu0 0.0
  %v1859 = vand.u32 %v1443, 4294901760
  %v1860 = vsub.f32 %v1443, %v1859
  %1861 = vmatpush1.msra.mxu0 %v1860
  %1862 = vmatprep.subr.mxu0 0.0
  %v1863 = vand.u32 %v1444, 4294901760
  %v1864 = vsub.f32 %v1444, %v1863
  %1865 = vmatpush1.msra.mxu0 %v1864
  %1866 = vmatprep.subr.mxu0 0.0
  %v1867 = vand.u32 %v1445, 4294901760
  %v1868 = vsub.f32 %v1445, %v1867
  %1869 = vmatpush1.msra.mxu0 %v1868
  %1870 = vmatprep.subr.mxu0 0.0
  %v1871 = vand.u32 %v1446, 4294901760
  %v1872 = vsub.f32 %v1446, %v1871
  %1873 = vmatpush1.msra.mxu0 %v1872
  %1874 = vmatprep.subr.mxu0 0.0
  %v1875 = vand.u32 %v1447, 4294901760
  %v1876 = vsub.f32 %v1447, %v1875
  %1877 = vmatpush1.msra.mxu0 %v1876
  %1878 = vmatprep.subr.mxu0 0.0
  %v1879 = vand.u32 %v1448, 4294901760
  %v1880 = vsub.f32 %v1448, %v1879
  %1881 = vmatpush1.msra.mxu0 %v1880
  %1882 = vmatprep.subr.mxu0 0.0
  %v1883 = vand.u32 %v1449, 4294901760
  %v1884 = vsub.f32 %v1449, %v1883
  %1885 = vmatpush1.msra.mxu0 %v1884
  %1886 = vmatprep.subr.mxu0 0.0
  %v1887 = vand.u32 %v1450, 4294901760
  %v1888 = vsub.f32 %v1450, %v1887
  %1889 = vmatpush1.msra.mxu0 %v1888
  %1890 = vmatprep.subr.mxu0 0.0
  %v1891 = vand.u32 %v1451, 4294901760
  %v1892 = vsub.f32 %v1451, %v1891
  %1893 = vmatpush1.msra.mxu0 %v1892
  %1894 = vmatprep.subr.mxu0 0.0
  %v1895 = vand.u32 %v1452, 4294901760
  %v1896 = vsub.f32 %v1452, %v1895
  %1897 = vmatpush1.msra.mxu0 %v1896
  %1898 = vmatprep.subr.mxu0 0.0
  %v1899 = vand.u32 %v1453, 4294901760
  %v1900 = vsub.f32 %v1453, %v1899
  %1901 = vmatpush1.msra.mxu0 %v1900
  %1902 = vmatprep.subr.mxu0 0.0
  %v1903 = vand.u32 %v1454, 4294901760
  %v1904 = vsub.f32 %v1454, %v1903
  %1905 = vmatpush1.msra.mxu0 %v1904
  %1906 = vmatprep.subr.mxu0 0.0
  %v1907 = vand.u32 %v1455, 4294901760
  %v1908 = vsub.f32 %v1455, %v1907
  %1909 = vmatpush1.msra.mxu0 %v1908
  %1910 = vmatprep.subr.mxu0 0.0
  %v1911 = vand.u32 %v1456, 4294901760
  %v1912 = vsub.f32 %v1456, %v1911
  %1913 = vmatpush1.msra.mxu0 %v1912
  %1914 = vmatprep.subr.mxu0 0.0
  %v1915 = vand.u32 %v1457, 4294901760
  %v1916 = vsub.f32 %v1457, %v1915
  %1917 = vmatpush1.msra.mxu0 %v1916
  %1918 = vmatprep.subr.mxu0 0.0
  %v1919 = vand.u32 %v1458, 4294901760
  %v1920 = vsub.f32 %v1458, %v1919
  %1921 = vmatpush1.msra.mxu0 %v1920
  %1922 = vmatprep.subr.mxu0 0.0
  %v1923 = vand.u32 %v1459, 4294901760
  %v1924 = vsub.f32 %v1459, %v1923
  %1925 = vmatpush1.msra.mxu0 %v1924
  %1926 = vmatprep.subr.mxu0 0.0
  %v1927 = vand.u32 %v1460, 4294901760
  %v1928 = vsub.f32 %v1460, %v1927
  %1929 = vmatpush1.msra.mxu0 %v1928
  %1930 = vmatprep.subr.mxu0 0.0
  %v1931 = vand.u32 %v1461, 4294901760
  %v1932 = vsub.f32 %v1461, %v1931
  %1933 = vmatpush1.msra.mxu0 %v1932
  %v1934 = vand.u32 %v1429, 4294901760
  %v1935 = vsub.f32 %v1429, %v1934
  %1936 = vmatprep.mubr.f32.mxu0 %v1935
  %v1937 = vand.u32 %v1428, 4294901760
  %v1938 = vsub.f32 %v1428, %v1937
  %1939 = vmatmul.mubr.f32.gmra.mrb[0].mxu0 %v1938
  %v1940 = vpop.f32.mrb[0].mxu0
  %v1941 = vadd.f32 %v1803, %v1940
  %v1942 = vpop.f32.mrb[0].mxu0
  %1943 = vdwg.mxu0
  %1944 = vmatprep.subr.mxu0 0.0
  %v1945 = vand.u32 %v1430, 4294901760
  %1946 = vmatpush1.msra.mxu0 %v1945
  %1947 = vmatprep.subr.mxu0 0.0
  %v1948 = vand.u32 %v1431, 4294901760
  %1949 = vmatpush1.msra.mxu0 %v1948
  %1950 = vmatprep.subr.mxu0 0.0
  %v1951 = vand.u32 %v1432, 4294901760
  %1952 = vmatpush1.msra.mxu0 %v1951
  %1953 = vmatprep.subr.mxu0 0.0
  %v1954 = vand.u32 %v1433, 4294901760
  %1955 = vmatpush1.msra.mxu0 %v1954
  %1956 = vmatprep.subr.mxu0 0.0
  %v1957 = vand.u32 %v1434, 4294901760
  %1958 = vmatpush1.msra.mxu0 %v1957
  %1959 = vmatprep.subr.mxu0 0.0
  %v1960 = vand.u32 %v1435, 4294901760
  %1961 = vmatpush1.msra.mxu0 %v1960
  %1962 = vmatprep.subr.mxu0 0.0
  %v1963 = vand.u32 %v1436, 4294901760
  %1964 = vmatpush1.msra.mxu0 %v1963
  %1965 = vmatprep.subr.mxu0 0.0
  %v1966 = vand.u32 %v1437, 4294901760
  %1967 = vmatpush1.msra.mxu0 %v1966
  %1968 = vmatprep.subr.mxu0 0.0
  %v1969 = vand.u32 %v1438, 4294901760
  %1970 = vmatpush1.msra.mxu0 %v1969
  %1971 = vmatprep.subr.mxu0 0.0
  %v1972 = vand.u32 %v1439, 4294901760
  %1973 = vmatpush1.msra.mxu0 %v1972
  %1974 = vmatprep.subr.mxu0 0.0
  %v1975 = vand.u32 %v1440, 4294901760
  %1976 = vmatpush1.msra.mxu0 %v1975
  %1977 = vmatprep.subr.mxu0 0.0
  %v1978 = vand.u32 %v1441, 4294901760
  %1979 = vmatpush1.msra.mxu0 %v1978
  %1980 = vmatprep.subr.mxu0 0.0
  %v1981 = vand.u32 %v1442, 4294901760
  %1982 = vmatpush1.msra.mxu0 %v1981
  %1983 = vmatprep.subr.mxu0 0.0
  %v1984 = vand.u32 %v1443, 4294901760
  %1985 = vmatpush1.msra.mxu0 %v1984
  %1986 = vmatprep.subr.mxu0 0.0
  %v1987 = vand.u32 %v1444, 4294901760
  %1988 = vmatpush1.msra.mxu0 %v1987
  %1989 = vmatprep.subr.mxu0 0.0
  %v1990 = vand.u32 %v1445, 4294901760
  %1991 = vmatpush1.msra.mxu0 %v1990
  %1992 = vmatprep.subr.mxu0 0.0
  %v1993 = vand.u32 %v1446, 4294901760
  %1994 = vmatpush1.msra.mxu0 %v1993
  %1995 = vmatprep.subr.mxu0 0.0
  %v1996 = vand.u32 %v1447, 4294901760
  %1997 = vmatpush1.msra.mxu0 %v1996
  %1998 = vmatprep.subr.mxu0 0.0
  %v1999 = vand.u32 %v1448, 4294901760
  %2000 = vmatpush1.msra.mxu0 %v1999
  %2001 = vmatprep.subr.mxu0 0.0
  %v2002 = vand.u32 %v1449, 4294901760
  %2003 = vmatpush1.msra.mxu0 %v2002
  %2004 = vmatprep.subr.mxu0 0.0
  %v2005 = vand.u32 %v1450, 4294901760
  %2006 = vmatpush1.msra.mxu0 %v2005
  %2007 = vmatprep.subr.mxu0 0.0
  %v2008 = vand.u32 %v1451, 4294901760
  %2009 = vmatpush1.msra.mxu0 %v2008
  %2010 = vmatprep.subr.mxu0 0.0
  %v2011 = vand.u32 %v1452, 4294901760
  %2012 = vmatpush1.msra.mxu0 %v2011
  %2013 = vmatprep.subr.mxu0 0.0
  %v2014 = vand.u32 %v1453, 4294901760
  %2015 = vmatpush1.msra.mxu0 %v2014
  %2016 = vmatprep.subr.mxu0 0.0
  %v2017 = vand.u32 %v1454, 4294901760
  %2018 = vmatpush1.msra.mxu0 %v2017
  %2019 = vmatprep.subr.mxu0 0.0
  %v2020 = vand.u32 %v1455, 4294901760
  %2021 = vmatpush1.msra.mxu0 %v2020
  %2022 = vmatprep.subr.mxu0 0.0
  %v2023 = vand.u32 %v1456, 4294901760
  %2024 = vmatpush1.msra.mxu0 %v2023
  %2025 = vmatprep.subr.mxu0 0.0
  %v2026 = vand.u32 %v1457, 4294901760
  %2027 = vmatpush1.msra.mxu0 %v2026
  %2028 = vmatprep.subr.mxu0 0.0
  %v2029 = vand.u32 %v1458, 4294901760
  %2030 = vmatpush1.msra.mxu0 %v2029
  %2031 = vmatprep.subr.mxu0 0.0
  %v2032 = vand.u32 %v1459, 4294901760
  %2033 = vmatpush1.msra.mxu0 %v2032
  %2034 = vmatprep.subr.mxu0 0.0
  %v2035 = vand.u32 %v1460, 4294901760
  %2036 = vmatpush1.msra.mxu0 %v2035
  %2037 = vmatprep.subr.mxu0 0.0
  %v2038 = vand.u32 %v1461, 4294901760
  %2039 = vmatpush1.msra.mxu0 %v2038
  %v2040 = vand.u32 %v1429, 4294901760
  %v2041 = vsub.f32 %v1429, %v2040
  %v2042 = vand.u32 %v2041, 4294901760
  %2043 = vmatprep.mubr.f32.mxu0 %v2042
  %v2044 = vand.u32 %v1428, 4294901760
  %v2045 = vsub.f32 %v1428, %v2044
  %v2046 = vand.u32 %v2045, 4294901760
  %2047 = vmatmul.mubr.f32.gmra.mrb[0].mxu0 %v2046
  %v2048 = vpop.f32.mrb[0].mxu0
  %v2049 = vadd.f32 %v1941, %v2048
  %v2050 = vpop.f32.mrb[0].mxu0
  %2051 = vdwg.mxu0
  %2052 = vmatprep.subr.mxu0 0.0
  %v2053 = vand.u32 %v1430, 4294901760
  %v2054 = vsub.f32 %v1430, %v2053
  %v2055 = vand.u32 %v2054, 4294901760
  %2056 = vmatpush1.msra.mxu0 %v2055
  %2057 = vmatprep.subr.mxu0 0.0
  %v2058 = vand.u32 %v1431, 4294901760
  %v2059 = vsub.f32 %v1431, %v2058
  %v2060 = vand.u32 %v2059, 4294901760
  %2061 = vmatpush1.msra.mxu0 %v2060
  %2062 = vmatprep.subr.mxu0 0.0
  %v2063 = vand.u32 %v1432, 4294901760
  %v2064 = vsub.f32 %v1432, %v2063
  %v2065 = vand.u32 %v2064, 4294901760
  %2066 = vmatpush1.msra.mxu0 %v2065
  %2067 = vmatprep.subr.mxu0 0.0
  %v2068 = vand.u32 %v1433, 4294901760
  %v2069 = vsub.f32 %v1433, %v2068
  %v2070 = vand.u32 %v2069, 4294901760
  %2071 = vmatpush1.msra.mxu0 %v2070
  %2072 = vmatprep.subr.mxu0 0.0
  %v2073 = vand.u32 %v1434, 4294901760
  %v2074 = vsub.f32 %v1434, %v2073
  %v2075 = vand.u32 %v2074, 4294901760
  %2076 = vmatpush1.msra.mxu0 %v2075
  %2077 = vmatprep.subr.mxu0 0.0
  %v2078 = vand.u32 %v1435, 4294901760
  %v2079 = vsub.f32 %v1435, %v2078
  %v2080 = vand.u32 %v2079, 4294901760
  %2081 = vmatpush1.msra.mxu0 %v2080
  %2082 = vmatprep.subr.mxu0 0.0
  %v2083 = vand.u32 %v1436, 4294901760
  %v2084 = vsub.f32 %v1436, %v2083
  %v2085 = vand.u32 %v2084, 4294901760
  %2086 = vmatpush1.msra.mxu0 %v2085
  %2087 = vmatprep.subr.mxu0 0.0
  %v2088 = vand.u32 %v1437, 4294901760
  %v2089 = vsub.f32 %v1437, %v2088
  %v2090 = vand.u32 %v2089, 4294901760
  %2091 = vmatpush1.msra.mxu0 %v2090
  %2092 = vmatprep.subr.mxu0 0.0
  %v2093 = vand.u32 %v1438, 4294901760
  %v2094 = vsub.f32 %v1438, %v2093
  %v2095 = vand.u32 %v2094, 4294901760
  %2096 = vmatpush1.msra.mxu0 %v2095
  %2097 = vmatprep.subr.mxu0 0.0
  %v2098 = vand.u32 %v1439, 4294901760
  %v2099 = vsub.f32 %v1439, %v2098
  %v2100 = vand.u32 %v2099, 4294901760
  %2101 = vmatpush1.msra.mxu0 %v2100
  %2102 = vmatprep.subr.mxu0 0.0
  %v2103 = vand.u32 %v1440, 4294901760
  %v2104 = vsub.f32 %v1440, %v2103
  %v2105 = vand.u32 %v2104, 4294901760
  %2106 = vmatpush1.msra.mxu0 %v2105
  %2107 = vmatprep.subr.mxu0 0.0
  %v2108 = vand.u32 %v1441, 4294901760
  %v2109 = vsub.f32 %v1441, %v2108
  %v2110 = vand.u32 %v2109, 4294901760
  %2111 = vmatpush1.msra.mxu0 %v2110
  %2112 = vmatprep.subr.mxu0 0.0
  %v2113 = vand.u32 %v1442, 4294901760
  %v2114 = vsub.f32 %v1442, %v2113
  %v2115 = vand.u32 %v2114, 4294901760
  %2116 = vmatpush1.msra.mxu0 %v2115
  %2117 = vmatprep.subr.mxu0 0.0
  %v2118 = vand.u32 %v1443, 4294901760
  %v2119 = vsub.f32 %v1443, %v2118
  %v2120 = vand.u32 %v2119, 4294901760
  %2121 = vmatpush1.msra.mxu0 %v2120
  %2122 = vmatprep.subr.mxu0 0.0
  %v2123 = vand.u32 %v1444, 4294901760
  %v2124 = vsub.f32 %v1444, %v2123
  %v2125 = vand.u32 %v2124, 4294901760
  %2126 = vmatpush1.msra.mxu0 %v2125
  %2127 = vmatprep.subr.mxu0 0.0
  %v2128 = vand.u32 %v1445, 4294901760
  %v2129 = vsub.f32 %v1445, %v2128
  %v2130 = vand.u32 %v2129, 4294901760
  %2131 = vmatpush1.msra.mxu0 %v2130
  %2132 = vmatprep.subr.mxu0 0.0
  %v2133 = vand.u32 %v1446, 4294901760
  %v2134 = vsub.f32 %v1446, %v2133
  %v2135 = vand.u32 %v2134, 4294901760
  %2136 = vmatpush1.msra.mxu0 %v2135
  %2137 = vmatprep.subr.mxu0 0.0
  %v2138 = vand.u32 %v1447, 4294901760
  %v2139 = vsub.f32 %v1447, %v2138
  %v2140 = vand.u32 %v2139, 4294901760
  %2141 = vmatpush1.msra.mxu0 %v2140
  %2142 = vmatprep.subr.mxu0 0.0
  %v2143 = vand.u32 %v1448, 4294901760
  %v2144 = vsub.f32 %v1448, %v2143
  %v2145 = vand.u32 %v2144, 4294901760
  %2146 = vmatpush1.msra.mxu0 %v2145
  %2147 = vmatprep.subr.mxu0 0.0
  %v2148 = vand.u32 %v1449, 4294901760
  %v2149 = vsub.f32 %v1449, %v2148
  %v2150 = vand.u32 %v2149, 4294901760
  %2151 = vmatpush1.msra.mxu0 %v2150
  %2152 = vmatprep.subr.mxu0 0.0
  %v2153 = vand.u32 %v1450, 4294901760
  %v2154 = vsub.f32 %v1450, %v2153
  %v2155 = vand.u32 %v2154, 4294901760
  %2156 = vmatpush1.msra.mxu0 %v2155
  %2157 = vmatprep.subr.mxu0 0.0
  %v2158 = vand.u32 %v1451, 4294901760
  %v2159 = vsub.f32 %v1451, %v2158
  %v2160 = vand.u32 %v2159, 4294901760
  %2161 = vmatpush1.msra.mxu0 %v2160
  %2162 = vmatprep.subr.mxu0 0.0
  %v2163 = vand.u32 %v1452, 4294901760
  %v2164 = vsub.f32 %v1452, %v2163
  %v2165 = vand.u32 %v2164, 4294901760
  %2166 = vmatpush1.msra.mxu0 %v2165
  %2167 = vmatprep.subr.mxu0 0.0
  %v2168 = vand.u32 %v1453, 4294901760
  %v2169 = vsub.f32 %v1453, %v2168
  %v2170 = vand.u32 %v2169, 4294901760
  %2171 = vmatpush1.msra.mxu0 %v2170
  %2172 = vmatprep.subr.mxu0 0.0
  %v2173 = vand.u32 %v1454, 4294901760
  %v2174 = vsub.f32 %v1454, %v2173
  %v2175 = vand.u32 %v2174, 4294901760
  %2176 = vmatpush1.msra.mxu0 %v2175
  %2177 = vmatprep.subr.mxu0 0.0
  %v2178 = vand.u32 %v1455, 4294901760
  %v2179 = vsub.f32 %v1455, %v2178
  %v2180 = vand.u32 %v2179, 4294901760
  %2181 = vmatpush1.msra.mxu0 %v2180
  %2182 = vmatprep.subr.mxu0 0.0
  %v2183 = vand.u32 %v1456, 4294901760
  %v2184 = vsub.f32 %v1456, %v2183
  %v2185 = vand.u32 %v2184, 4294901760
  %2186 = vmatpush1.msra.mxu0 %v2185
  %2187 = vmatprep.subr.mxu0 0.0
  %v2188 = vand.u32 %v1457, 4294901760
  %v2189 = vsub.f32 %v1457, %v2188
  %v2190 = vand.u32 %v2189, 4294901760
  %2191 = vmatpush1.msra.mxu0 %v2190
  %2192 = vmatprep.subr.mxu0 0.0
  %v2193 = vand.u32 %v1458, 4294901760
  %v2194 = vsub.f32 %v1458, %v2193
  %v2195 = vand.u32 %v2194, 4294901760
  %2196 = vmatpush1.msra.mxu0 %v2195
  %2197 = vmatprep.subr.mxu0 0.0
  %v2198 = vand.u32 %v1459, 4294901760
  %v2199 = vsub.f32 %v1459, %v2198
  %v2200 = vand.u32 %v2199, 4294901760
  %2201 = vmatpush1.msra.mxu0 %v2200
  %2202 = vmatprep.subr.mxu0 0.0
  %v2203 = vand.u32 %v1460, 4294901760
  %v2204 = vsub.f32 %v1460, %v2203
  %v2205 = vand.u32 %v2204, 4294901760
  %2206 = vmatpush1.msra.mxu0 %v2205
  %2207 = vmatprep.subr.mxu0 0.0
  %v2208 = vand.u32 %v1461, 4294901760
  %v2209 = vsub.f32 %v1461, %v2208
  %v2210 = vand.u32 %v2209, 4294901760
  %2211 = vmatpush1.msra.mxu0 %v2210
  %v2212 = vand.u32 %v1429, 4294901760
  %2213 = vmatprep.mubr.f32.mxu0 %v2212
  %v2214 = vand.u32 %v1428, 4294901760
  %2215 = vmatmul.mubr.f32.gmra.mrb[0].mxu0 %v2214
  %v2216 = vpop.f32.mrb[0].mxu0
  %v2217 = vadd.f32 %v2049, %v2216
  %v2218 = vpop.f32.mrb[0].mxu0
  %2219 = vdwg.mxu0
  %2220 = vmatprep.subr.mxu0 0.0
  %v2221 = vand.u32 %v1430, 4294901760
  %2222 = vmatpush1.msra.mxu0 %v2221
  %2223 = vmatprep.subr.mxu0 0.0
  %v2224 = vand.u32 %v1431, 4294901760
  %2225 = vmatpush1.msra.mxu0 %v2224
  %2226 = vmatprep.subr.mxu0 0.0
  %v2227 = vand.u32 %v1432, 4294901760
  %2228 = vmatpush1.msra.mxu0 %v2227
  %2229 = vmatprep.subr.mxu0 0.0
  %v2230 = vand.u32 %v1433, 4294901760
  %2231 = vmatpush1.msra.mxu0 %v2230
  %2232 = vmatprep.subr.mxu0 0.0
  %v2233 = vand.u32 %v1434, 4294901760
  %2234 = vmatpush1.msra.mxu0 %v2233
  %2235 = vmatprep.subr.mxu0 0.0
  %v2236 = vand.u32 %v1435, 4294901760
  %2237 = vmatpush1.msra.mxu0 %v2236
  %2238 = vmatprep.subr.mxu0 0.0
  %v2239 = vand.u32 %v1436, 4294901760
  %2240 = vmatpush1.msra.mxu0 %v2239
  %2241 = vmatprep.subr.mxu0 0.0
  %v2242 = vand.u32 %v1437, 4294901760
  %2243 = vmatpush1.msra.mxu0 %v2242
  %2244 = vmatprep.subr.mxu0 0.0
  %v2245 = vand.u32 %v1438, 4294901760
  %2246 = vmatpush1.msra.mxu0 %v2245
  %2247 = vmatprep.subr.mxu0 0.0
  %v2248 = vand.u32 %v1439, 4294901760
  %2249 = vmatpush1.msra.mxu0 %v2248
  %2250 = vmatprep.subr.mxu0 0.0
  %v2251 = vand.u32 %v1440, 4294901760
  %2252 = vmatpush1.msra.mxu0 %v2251
  %2253 = vmatprep.subr.mxu0 0.0
  %v2254 = vand.u32 %v1441, 4294901760
  %2255 = vmatpush1.msra.mxu0 %v2254
  %2256 = vmatprep.subr.mxu0 0.0
  %v2257 = vand.u32 %v1442, 4294901760
  %2258 = vmatpush1.msra.mxu0 %v2257
  %2259 = vmatprep.subr.mxu0 0.0
  %v2260 = vand.u32 %v1443, 4294901760
  %2261 = vmatpush1.msra.mxu0 %v2260
  %2262 = vmatprep.subr.mxu0 0.0
  %v2263 = vand.u32 %v1444, 4294901760
  %2264 = vmatpush1.msra.mxu0 %v2263
  %2265 = vmatprep.subr.mxu0 0.0
  %v2266 = vand.u32 %v1445, 4294901760
  %2267 = vmatpush1.msra.mxu0 %v2266
  %2268 = vmatprep.subr.mxu0 0.0
  %v2269 = vand.u32 %v1446, 4294901760
  %2270 = vmatpush1.msra.mxu0 %v2269
  %2271 = vmatprep.subr.mxu0 0.0
  %v2272 = vand.u32 %v1447, 4294901760
  %2273 = vmatpush1.msra.mxu0 %v2272
  %2274 = vmatprep.subr.mxu0 0.0
  %v2275 = vand.u32 %v1448, 4294901760
  %2276 = vmatpush1.msra.mxu0 %v2275
  %2277 = vmatprep.subr.mxu0 0.0
  %v2278 = vand.u32 %v1449, 4294901760
  %2279 = vmatpush1.msra.mxu0 %v2278
  %2280 = vmatprep.subr.mxu0 0.0
  %v2281 = vand.u32 %v1450, 4294901760
  %2282 = vmatpush1.msra.mxu0 %v2281
  %2283 = vmatprep.subr.mxu0 0.0
  %v2284 = vand.u32 %v1451, 4294901760
  %2285 = vmatpush1.msra.mxu0 %v2284
  %2286 = vmatprep.subr.mxu0 0.0
  %v2287 = vand.u32 %v1452, 4294901760
  %2288 = vmatpush1.msra.mxu0 %v2287
  %2289 = vmatprep.subr.mxu0 0.0
  %v2290 = vand.u32 %v1453, 4294901760
  %2291 = vmatpush1.msra.mxu0 %v2290
  %2292 = vmatprep.subr.mxu0 0.0
  %v2293 = vand.u32 %v1454, 4294901760
  %2294 = vmatpush1.msra.mxu0 %v2293
  %2295 = vmatprep.subr.mxu0 0.0
  %v2296 = vand.u32 %v1455, 4294901760
  %2297 = vmatpush1.msra.mxu0 %v2296
  %2298 = vmatprep.subr.mxu0 0.0
  %v2299 = vand.u32 %v1456, 4294901760
  %2300 = vmatpush1.msra.mxu0 %v2299
  %2301 = vmatprep.subr.mxu0 0.0
  %v2302 = vand.u32 %v1457, 4294901760
  %2303 = vmatpush1.msra.mxu0 %v2302
  %2304 = vmatprep.subr.mxu0 0.0
  %v2305 = vand.u32 %v1458, 4294901760
  %2306 = vmatpush1.msra.mxu0 %v2305
  %2307 = vmatprep.subr.mxu0 0.0
  %v2308 = vand.u32 %v1459, 4294901760
  %2309 = vmatpush1.msra.mxu0 %v2308
  %2310 = vmatprep.subr.mxu0 0.0
  %v2311 = vand.u32 %v1460, 4294901760
  %2312 = vmatpush1.msra.mxu0 %v2311
  %2313 = vmatprep.subr.mxu0 0.0
  %v2314 = vand.u32 %v1461, 4294901760
  %2315 = vmatpush1.msra.mxu0 %v2314
  %v2316 = vand.u32 %v1429, 4294901760
  %2317 = vmatprep.mubr.f32.mxu0 %v2316
  %v2318 = vand.u32 %v1428, 4294901760
  %2319 = vmatmul.mubr.f32.gmra.mrb[0].mxu0 %v2318
  %v2320 = vpop.f32.mrb[0].mxu0
  %v2321 = vadd.f32 %v2217, %v2320
  %v2322 = vpop.f32.mrb[0].mxu0
  %2323 = vdwg.mxu0
  %v2324 = vstv %s23
  %v2325 = vmul.f32 %v2321, %v2324
  %v2326 = vsel %vm918, %v2325, -inf
  %2327 = vmax.xlane.f32.xlu0 %v2326
  %v2328 = vpop.xlane.xlu0 %2327
  %v2329 = vsub.f32 %v2325, %v2328
  %v2330 = vmul.f32 %v2329, 1.442695
  %v2331 = vpow.pop %v2330
  %v2332 = vsel %vm918, %v2331, 0.0
  %2333 = vadd.xlane.f32.xlu0 %v2332
  %v2334 = vpop.xlane.xlu0 %2333
  %v2335 = vrcp.pop %v2334
  %v2336 = vmul.f32 %v2331, %v2335
  %v2337 = vmul.f32 %v2336, %v2321
  %v2338 = vsel %vm918, %v2337, 0.0
  %2339 = vadd.xlane.f32.xlu0 %v2338
  %v2340 = vpop.xlane.xlu0 %2339
  %2341 = vst [vmem:[%s5] sm:$0xff] %v2340
  %2342 = vst [vmem:[%s5 + $0x8] sm:$0xff] %v2340
  // Predicated region
  $region22: #{sa1_forward.1} parent=0 // pred_check
    _
  $region23: #{sa1_forward.1} parent=0 // pred_check_branch
    %2344 = sbr.rel (0) target = $region25
  $region24: #{sa1_forward.1} parent=0 // pred_region
    _
  $region25: #{sa1_forward.1} parent=0 // pred_fallthru
    _
  // Predicated region
  $region26: #{sa1_forward.1} parent=0 // pred_check
    _
  $region27: #{sa1_forward.1} parent=0 // pred_check_branch
    %2346 = sbr.rel (0) target = $region29
  $region28: #{sa1_forward.1} parent=0 // pred_region
    _
  $region29: #{sa1_forward.1} parent=0 // pred_fallthru
    _

</llo_original>
